<compile_context>
chip_gen: v6e
topology: v6e:2x2x1
jax: 0.10.0
libtpu: 0.0.40
codegen_flags: <defaults>
</compile_context>

<pallas_src>
import functools

import jax
import jax.numpy as jnp
from jax.experimental import pallas as pl
from jax.experimental.pallas import tpu as pltpu

_LANE = 128      # f32 lane width
_C_IN = 256      # netC input channels
_C_MID = 16      # compress channels
_N_CLS = 2       # fc output classes


# ---------------------------------------------------------------------------
# Fused kernel: tiled global-average-pool (accumulate) + SE head + fc epilogue
# ---------------------------------------------------------------------------
def _netc_kernel(x_ref, w1t_ref, b1_ref, w2t_ref, b2_ref, wfc_ref, bfc_ref,
                 mask_ref, logits_ref, acc_ref,
                 *, hw, st, inv_hw, chunked):
    j = pl.program_id(1)

    @pl.when(j == 0)
    def _init():
        acc_ref[...] = jnp.zeros_like(acc_ref)

    x = x_ref[...]                                   # (bt, 256, st) f32

    # Mask the undefined padding of a partial final spatial block.
    if hw % st != 0:
        pos = j * st + jax.lax.broadcasted_iota(jnp.int32, x.shape, 2)
        x = jnp.where(pos < hw, x, 0.0)

    if chunked:
        # Lane-aligned static slices -> pure VPU adds; defer the cross-lane
        # (XLU) reduce to the epilogue.
        s = x[:, :, 0:_LANE]
        for k in range(1, st // _LANE):
            s = s + x[:, :, k * _LANE:(k + 1) * _LANE]
        acc_ref[...] += s                            # (bt, 256, 128)
    else:
        acc_ref[...] += x                            # (bt, 256, st) (single step)

    @pl.when(j == pl.num_programs(1) - 1)
    def _epilogue():
        # Global mean: single cross-lane reduce + multiply by 1/(H*W).
        pooled = jnp.sum(acc_ref[...], axis=-1) * inv_hw              # (bt, 256)

        # compress (1x1 conv == dense) + relu
        h = jnp.dot(pooled, w1t_ref[...],
                    preferred_element_type=jnp.float32) + b1_ref[...]
        h = jnp.maximum(h, 0.0)                                       # (bt, 16)

        # excitation (pre-sigmoid) -> sigmoid mask
        e = jnp.dot(h, w2t_ref[...],
                    preferred_element_type=jnp.float32) + b2_ref[...]  # (bt, 256)
        mask_ref[...] = jax.nn.sigmoid(e)

        # fc on PRE-sigmoid e, folded through the excitation weights:
        # logits = e @ wfct + bfc == h @ (w2t@wfct) + (b2@wfct + bfc)
        logits_ref[...] = (
            jnp.dot(h, wfc_ref[...], preferred_element_type=jnp.float32)
            + bfc_ref[...]
        )                                                             # (bt, 2)


# ---------------------------------------------------------------------------
# One-time parameter preparation (transposes + fc folding hoisted out of the
# per-forward path).
# ---------------------------------------------------------------------------
def prepare_params(params):
    w1t = jnp.asarray(params["compress_w"]).T                  # (256, 16)
    b1 = jnp.asarray(params["compress_b"]).reshape(1, _C_MID)  # (1, 16)
    w2t = jnp.asarray(params["excitation_w"]).T                # (16, 256)
    b2 = jnp.asarray(params["excitation_b"]).reshape(1, _C_IN) # (1, 256)
    wfct = jnp.asarray(params["fc_w"]).T                       # (256, 2)
    bfc = jnp.asarray(params["fc_b"]).reshape(1, _N_CLS)       # (1, 2)
    return {
        "w1t": w1t,
        "b1": b1,
        "w2t": w2t,
        "b2": b2,
        "wfc": w2t @ wfct,          # (16, 2)  folded fc weight
        "bfc": b2 @ wfct + bfc,     # (1, 2)   folded fc bias
    }


# ---------------------------------------------------------------------------
# Forward wrapper
# ---------------------------------------------------------------------------
def netc_forward(x, prepared, *, batch_tile=8, vmem_tile_bytes=4 * 1024 * 1024):
    """x: (b, 256, H, W) f32 NCHW.  Returns (mask (b,256,1,1), logits (b,2))."""
    b, c, H, W = x.shape
    assert c == _C_IN, "netC expects 256 input channels"
    hw = H * W
    x_flat = x.reshape(b, c, hw)                 # contiguous view, no copy

    # Batch tiling (parallel axis; v7x megacore).
    bt = min(b, batch_tile)
    grid_b = pl.cdiv(b, bt)

    # Spatial tiling against a per-buffer VMEM budget (double-buffered by
    # the pipeline).  Tile is a multiple of 128 lanes unless hw fits whole.
    bytes_per_spatial = bt * c * 4
    max_st = max(_LANE, (vmem_tile_bytes // bytes_per_spatial) // _LANE * _LANE)
    if hw <= max_st:
        st = hw
        chunked = (hw % _LANE == 0)
    else:
        st = max_st
        chunked = True
    grid_s = pl.cdiv(hw, st)
    acc_lane = _LANE if chunked else st

    kernel = functools.partial(
        _netc_kernel, hw=hw, st=st, inv_hw=float(1.0 / hw), chunked=chunked)

    mask2d, logits = pl.pallas_call(
        kernel,
        out_shape=(
            jax.ShapeDtypeStruct((b, _C_IN), jnp.float32),
            jax.ShapeDtypeStruct((b, _N_CLS), jnp.float32),
        ),
        grid_spec=pltpu.PrefetchScalarGridSpec(
            num_scalar_prefetch=0,
            grid=(grid_b, grid_s),
            in_specs=[
                pl.BlockSpec((bt, c, st), lambda i, j: (i, 0, j)),      # x
                pl.BlockSpec((c, _C_MID), lambda i, j: (0, 0)),         # w1t
                pl.BlockSpec((1, _C_MID), lambda i, j: (0, 0)),         # b1
                pl.BlockSpec((_C_MID, c), lambda i, j: (0, 0)),         # w2t
                pl.BlockSpec((1, c), lambda i, j: (0, 0)),              # b2
                pl.BlockSpec((_C_MID, _N_CLS), lambda i, j: (0, 0)),    # wfc fused
                pl.BlockSpec((1, _N_CLS), lambda i, j: (0, 0)),         # bfc fused
            ],
            out_specs=(
                pl.BlockSpec((bt, _C_IN), lambda i, j: (i, 0)),         # mask
                pl.BlockSpec((bt, _N_CLS), lambda i, j: (i, 0)),        # logits
            ),
            scratch_shapes=[pltpu.VMEM((bt, c, acc_lane), jnp.float32)],
        ),
        compiler_params=pltpu.CompilerParams(
            dimension_semantics=("parallel", "arbitrary"),
        ),
    )(x_flat, prepared["w1t"], prepared["b1"], prepared["w2t"],
      prepared["b2"], prepared["wfc"], prepared["bfc"])

    mask = mask2d.reshape(b, _C_IN, 1, 1)        # match Conv2d output (b, c, 1, 1)
    return mask, logits


def init_params(key):
    """Deterministic synthetic parameters matching netC.__init__ shapes."""
    ks = jax.random.split(key, 6)
    return {
        # Conv2d(256, 16, 1): weight (16, 256, 1, 1) -> squeeze to (16, 256)
        "compress_w": jax.random.normal(ks[0], (16, 256), jnp.float32) * 0.05,
        "compress_b": jax.random.normal(ks[1], (16,), jnp.float32) * 0.05,
        # Conv2d(16, 256, 1): weight (256, 16, 1, 1) -> (256, 16)
        "excitation_w": jax.random.normal(ks[2], (256, 16), jnp.float32) * 0.05,
        "excitation_b": jax.random.normal(ks[3], (256,), jnp.float32) * 0.05,
        # Linear(256, 2): weight (2, 256)
        "fc_w": jax.random.normal(ks[4], (2, 256), jnp.float32) * 0.05,
        "fc_b": jax.random.normal(ks[5], (2,), jnp.float32) * 0.05,
    }


def _reference(x, params):
    """Pure-JAX reference of the PyTorch forward (for a sanity check)."""
    b = x.shape[0]
    pooled = jnp.mean(x, axis=(2, 3))                                  # (b, 256)
    h = jnp.maximum(pooled @ params["compress_w"].T + params["compress_b"], 0.0)
    e = h @ params["excitation_w"].T + params["excitation_b"]          # (b, 256)
    mask = jax.nn.sigmoid(e).reshape(b, 256, 1, 1)
    logits = e @ params["fc_w"].T + params["fc_b"]                     # (b, 2)
    return mask, logits


if __name__ == "__main__":
    key = jax.random.PRNGKey(0)
    k_x, k_p = jax.random.split(key)

    # small shapes consistent with the module: batch=2, channels fixed at 256,
    # spatial 8x8
    x = jax.random.normal(k_x, (2, 256, 8, 8), jnp.float32)
    params = init_params(k_p)
    prepared = prepare_params(params)      # one-time transpose/fold, outside fwd

    mask, logits = netc_forward(x, prepared)
    jax.block_until_ready((mask, logits))

    assert mask.shape == (2, 256, 1, 1)
    assert logits.shape == (2, 2)

    ref_mask, ref_logits = _reference(x, params)
    assert jnp.allclose(mask, ref_mask, atol=1e-4, rtol=1e-4)
    assert jnp.allclose(logits, ref_logits, atol=1e-4, rtol=1e-4)

    print("KERNEL_OK")
</pallas_src>

<mosaic_0001>
module attributes {stable_mosaic.version = 11 : i64} {
  func.func @_netc_kernel(%arg0: i32, %arg1: i32, %arg2: memref<2x256x64xf32, #tpu.memory_space<vmem>>, %arg3: memref<256x16xf32, #tpu.memory_space<vmem>>, %arg4: memref<1x16xf32, #tpu.memory_space<vmem>>, %arg5: memref<16x256xf32, #tpu.memory_space<vmem>>, %arg6: memref<1x256xf32, #tpu.memory_space<vmem>>, %arg7: memref<16x2xf32, #tpu.memory_space<vmem>>, %arg8: memref<1x2xf32, #tpu.memory_space<vmem>>, %arg9: memref<2x256xf32, #tpu.memory_space<vmem>>, %arg10: memref<2x2xf32, #tpu.memory_space<vmem>>, %arg11: memref<2x256x64xf32, #tpu.memory_space<vmem>>) attributes {dimension_semantics = [#tpu.dimension_semantics<parallel>, #tpu.dimension_semantics<arbitrary>], iteration_bounds = array<i64: 1, 1>, scalar_prefetch = 0 : i64, scratch_operands = 1 : i64, tpu.core_type = #tpu.core_type<tc>, window_params = [{transform_indices = @transform_0, window_bounds = array<i64: 2, 256, 64>}, {pipeline_mode = #tpu.pipeline_mode<synchronous>, transform_indices = @transform_1, window_bounds = array<i64: 256, 16>}, {pipeline_mode = #tpu.pipeline_mode<synchronous>, transform_indices = @transform_2, window_bounds = array<i64: 1, 16>}, {pipeline_mode = #tpu.pipeline_mode<synchronous>, transform_indices = @transform_3, window_bounds = array<i64: 16, 256>}, {pipeline_mode = #tpu.pipeline_mode<synchronous>, transform_indices = @transform_4, window_bounds = array<i64: 1, 256>}, {pipeline_mode = #tpu.pipeline_mode<synchronous>, transform_indices = @transform_5, window_bounds = array<i64: 16, 2>}, {pipeline_mode = #tpu.pipeline_mode<synchronous>, transform_indices = @transform_6, window_bounds = array<i64: 1, 2>}, {transform_indices = @transform_7, window_bounds = array<i64: 2, 256>}, {transform_indices = @transform_8, window_bounds = array<i64: 2, 2>}]} {
    %c0_i32 = arith.constant 0 : i32
    %0 = arith.cmpi eq, %arg1, %c0_i32 : i32
    %1 = arith.extui %0 : i1 to i32
    %c0_i32_0 = arith.constant 0 : i32
    %2 = arith.cmpi ne, %1, %c0_i32_0 : i32
    scf.if %2 {
      %cst = arith.constant 0.000000e+00 : f32
      %10 = vector.broadcast %cst : f32 to vector<2x256x64xf32>
      %c0_11 = arith.constant 0 : index
      %c0_12 = arith.constant 0 : index
      %c0_13 = arith.constant 0 : index
      %11 = vector.load %arg11[%c0_11, %c0_12, %c0_13] : memref<2x256x64xf32, #tpu.memory_space<vmem>>, vector<2x256x64xf32>
      tpu.vector_store %arg11[%c0_11, %c0_12, %c0_13], %10 {strides = array<i32>} : memref<2x256x64xf32, #tpu.memory_space<vmem>>, vector<2x256x64xf32>,
    } else {
    }
    %c0 = arith.constant 0 : index
    %c0_1 = arith.constant 0 : index
    %c0_2 = arith.constant 0 : index
    %3 = vector.load %arg2[%c0, %c0_1, %c0_2] : memref<2x256x64xf32, #tpu.memory_space<vmem>>, vector<2x256x64xf32>
    %c0_3 = arith.constant 0 : index
    %c0_4 = arith.constant 0 : index
    %c0_5 = arith.constant 0 : index
    %4 = vector.load %arg11[%c0_3, %c0_4, %c0_5] : memref<2x256x64xf32, #tpu.memory_space<vmem>>, vector<2x256x64xf32>
    %5 = arith.addf %4, %3 : vector<2x256x64xf32>
    %c0_6 = arith.constant 0 : index
    %c0_7 = arith.constant 0 : index
    %c0_8 = arith.constant 0 : index
    %6 = vector.load %arg11[%c0_6, %c0_7, %c0_8] : memref<2x256x64xf32, #tpu.memory_space<vmem>>, vector<2x256x64xf32>
    tpu.vector_store %arg11[%c0_6, %c0_7, %c0_8], %5 {strides = array<i32>} : memref<2x256x64xf32, #tpu.memory_space<vmem>>, vector<2x256x64xf32>,
    %c0_i32_9 = arith.constant 0 : i32
    %7 = arith.cmpi eq, %arg1, %c0_i32_9 : i32
    %8 = arith.extui %7 : i1 to i32
    %c0_i32_10 = arith.constant 0 : i32
    %9 = arith.cmpi ne, %8, %c0_i32_10 : i32
    scf.if %9 {
      %c0_11 = arith.constant 0 : index
      %c0_12 = arith.constant 0 : index
      %c0_13 = arith.constant 0 : index
      %10 = vector.load %arg11[%c0_11, %c0_12, %c0_13] : memref<2x256x64xf32, #tpu.memory_space<vmem>>, vector<2x256x64xf32>
      %cst = arith.constant dense<0.000000e+00> : vector<2x256xf32>
      %11 = vector.multi_reduction <add>, %10, %cst [2] : vector<2x256x64xf32> to vector<2x256xf32>
      %cst_14 = arith.constant 1.562500e-02 : f32
      %12 = vector.broadcast %cst_14 : f32 to vector<2x256xf32>
      %13 = arith.mulf %11, %12 : vector<2x256xf32>
      %c0_15 = arith.constant 0 : index
      %c0_16 = arith.constant 0 : index
      %14 = vector.load %arg3[%c0_15, %c0_16] : memref<256x16xf32, #tpu.memory_space<vmem>>, vector<256x16xf32>
      %cst_17 = arith.constant dense<0.000000e+00> : vector<2x16xf32>
      %15 = tpu.matmul %13, %14, %cst_17 {dimension_numbers = #tpu.dot_dimension_numbers<[1], [0], [0], [1], [0, 0, 1, 1], [], []>} : vector<2x256xf32>, vector<256x16xf32>, vector<2x16xf32> -> vector<2x16xf32>
      %c0_18 = arith.constant 0 : index
      %c0_19 = arith.constant 0 : index
      %16 = vector.load %arg4[%c0_18, %c0_19] : memref<1x16xf32, #tpu.memory_space<vmem>>, vector<1x16xf32>
      %17 = vector.broadcast %16 : vector<1x16xf32> to vector<2x16xf32>
      %18 = arith.addf %15, %17 : vector<2x16xf32>
      %cst_20 = arith.constant 0.000000e+00 : f32
      %19 = vector.broadcast %cst_20 : f32 to vector<2x16xf32>
      %20 = arith.maximumf %18, %19 : vector<2x16xf32>
      %c0_21 = arith.constant 0 : index
      %c0_22 = arith.constant 0 : index
      %21 = vector.load %arg5[%c0_21, %c0_22] : memref<16x256xf32, #tpu.memory_space<vmem>>, vector<16x256xf32>
      %cst_23 = arith.constant dense<0.000000e+00> : vector<2x256xf32>
      %22 = tpu.matmul %20, %21, %cst_23 {dimension_numbers = #tpu.dot_dimension_numbers<[1], [0], [0], [1], [0, 0, 1, 1], [], []>} : vector<2x16xf32>, vector<16x256xf32>, vector<2x256xf32> -> vector<2x256xf32>
      %c0_24 = arith.constant 0 : index
      %c0_25 = arith.constant 0 : index
      %23 = vector.load %arg6[%c0_24, %c0_25] : memref<1x256xf32, #tpu.memory_space<vmem>>, vector<1x256xf32>
      %24 = vector.broadcast %23 : vector<1x256xf32> to vector<2x256xf32>
      %25 = arith.addf %22, %24 : vector<2x256xf32>
      %26 = arith.negf %25 : vector<2x256xf32>
      %27 = math.exp %26 : vector<2x256xf32>
      %cst_26 = arith.constant 1.000000e+00 : f32
      %28 = vector.broadcast %cst_26 : f32 to vector<2x256xf32>
      %29 = arith.addf %28, %27 : vector<2x256xf32>
      %30 = arith.divf %28, %29 : vector<2x256xf32>
      %c0_27 = arith.constant 0 : index
      %c0_28 = arith.constant 0 : index
      %31 = vector.load %arg9[%c0_27, %c0_28] : memref<2x256xf32, #tpu.memory_space<vmem>>, vector<2x256xf32>
      tpu.vector_store %arg9[%c0_27, %c0_28], %30 {strides = array<i32>} : memref<2x256xf32, #tpu.memory_space<vmem>>, vector<2x256xf32>,
      %c0_29 = arith.constant 0 : index
      %c0_30 = arith.constant 0 : index
      %32 = vector.load %arg7[%c0_29, %c0_30] : memref<16x2xf32, #tpu.memory_space<vmem>>, vector<16x2xf32>
      %cst_31 = arith.constant dense<0.000000e+00> : vector<2x2xf32>
      %33 = tpu.matmul %20, %32, %cst_31 {dimension_numbers = #tpu.dot_dimension_numbers<[1], [0], [0], [1], [0, 0, 1, 1], [], []>} : vector<2x16xf32>, vector<16x2xf32>, vector<2x2xf32> -> vector<2x2xf32>
      %c0_32 = arith.constant 0 : index
      %c0_33 = arith.constant 0 : index
      %34 = vector.load %arg8[%c0_32, %c0_33] : memref<1x2xf32, #tpu.memory_space<vmem>>, vector<1x2xf32>
      %35 = vector.broadcast %34 : vector<1x2xf32> to vector<2x2xf32>
      %36 = arith.addf %33, %35 : vector<2x2xf32>
      %c0_34 = arith.constant 0 : index
      %c0_35 = arith.constant 0 : index
      %37 = vector.load %arg10[%c0_34, %c0_35] : memref<2x2xf32, #tpu.memory_space<vmem>>, vector<2x2xf32>
      tpu.vector_store %arg10[%c0_34, %c0_35], %36 {strides = array<i32>} : memref<2x2xf32, #tpu.memory_space<vmem>>, vector<2x2xf32>,
    } else {
    }
    return
  }
  func.func @transform_0(%arg0: i32, %arg1: i32) -> (i32, i32, i32) {
    %c0_i32 = arith.constant 0 : i32
    %c0_i32_0 = arith.constant 0 : i32
    return %arg0, %c0_i32, %arg1 : i32, i32, i32
  }
  func.func @transform_1(%arg0: i32, %arg1: i32) -> (i32, i32) {
    %c0_i32 = arith.constant 0 : i32
    %c0_i32_0 = arith.constant 0 : i32
    %c0_i32_1 = arith.constant 0 : i32
    return %c0_i32, %c0_i32_0 : i32, i32
  }
  func.func @transform_2(%arg0: i32, %arg1: i32) -> (i32, i32) {
    %c0_i32 = arith.constant 0 : i32
    %c0_i32_0 = arith.constant 0 : i32
    %c0_i32_1 = arith.constant 0 : i32
    return %c0_i32, %c0_i32_0 : i32, i32
  }
  func.func @transform_3(%arg0: i32, %arg1: i32) -> (i32, i32) {
    %c0_i32 = arith.constant 0 : i32
    %c0_i32_0 = arith.constant 0 : i32
    %c0_i32_1 = arith.constant 0 : i32
    return %c0_i32, %c0_i32_0 : i32, i32
  }
  func.func @transform_4(%arg0: i32, %arg1: i32) -> (i32, i32) {
    %c0_i32 = arith.constant 0 : i32
    %c0_i32_0 = arith.constant 0 : i32
    %c0_i32_1 = arith.constant 0 : i32
    return %c0_i32, %c0_i32_0 : i32, i32
  }
  func.func @transform_5(%arg0: i32, %arg1: i32) -> (i32, i32) {
    %c0_i32 = arith.constant 0 : i32
    %c0_i32_0 = arith.constant 0 : i32
    %c0_i32_1 = arith.constant 0 : i32
    return %c0_i32, %c0_i32_0 : i32, i32
  }
  func.func @transform_6(%arg0: i32, %arg1: i32) -> (i32, i32) {
    %c0_i32 = arith.constant 0 : i32
    %c0_i32_0 = arith.constant 0 : i32
    %c0_i32_1 = arith.constant 0 : i32
    return %c0_i32, %c0_i32_0 : i32, i32
  }
  func.func @transform_7(%arg0: i32, %arg1: i32) -> (i32, i32) {
    %c0_i32 = arith.constant 0 : i32
    %c0_i32_0 = arith.constant 0 : i32
    return %arg0, %c0_i32 : i32, i32
  }
  func.func @transform_8(%arg0: i32, %arg1: i32) -> (i32, i32) {
    %c0_i32 = arith.constant 0 : i32
    %c0_i32_0 = arith.constant 0 : i32
    return %arg0, %c0_i32 : i32, i32
  }
}

</mosaic_0001>

<llo_original>
// kernel: tpu_custom_call.1
$region0: #{tpu_custom_call.1}
  #allocation0 [shape = 'u32[]', space=smem, size = 0x4, offset = 0x4, fixed_abs, tag = 'smem constant byte address 0x4 - core index']
  #allocation1 [shape = 'u32[144,128]{1,0:T(1,128)}', space=vmem, size = 0x12000, scoped, tag = 'internal scratch']
  #allocation2 [shape = 'f32[2,256,64]{2,1,0:T(8,128)}', space=vmem, size = 0x40000, scoped, tag = 'scratch operand']
  %s0 = inlined_call_operand.vmem [shape: f32[2,256,64], index: 0, kind: input, shape index: {}]
  %s1 = inlined_call_operand.vmem [shape: f32[256,16], index: 1, kind: input, shape index: {}]
  %s2 = inlined_call_operand.vmem [shape: f32[1,16], index: 2, kind: input, shape index: {}]
  %s3 = inlined_call_operand.vmem [shape: f32[16,256], index: 3, kind: input, shape index: {}]
  %s4 = inlined_call_operand.vmem [shape: f32[1,256], index: 4, kind: input, shape index: {}]
  %s5 = inlined_call_operand.vmem [shape: f32[16,2], index: 5, kind: input, shape index: {}]
  %s6 = inlined_call_operand.vmem [shape: f32[1,2], index: 6, kind: input, shape index: {}]
  %s7 = inlined_call_operand.hbm [shape: f32[2,256], index: 7, kind: output, shape index: {0}]
  %s8 = inlined_call_operand.hbm [shape: f32[2,2], index: 8, kind: output, shape index: {1}]
  %9 = xla_tuple %s7, %s8
  %s10 = sld [smem:[#allocation0]]
  $region54: #{tpu_custom_call.1} parent=0
    _
  %s12 = ssub.s32 1, %s10
  %s13 = scalar_select 0, %s12, %s10
  $region1: #{tpu_custom_call.1} parent=0
    #allocation3 [shape = 'u8[2048]{0}', space=vmem, size = 0x800, scoped, tag = 'output window, operand 0, single buffered']
    #allocation4 [shape = 's32[1]{0}', space=sflag, size = 0x4, scoped, tag = 'scoped memory for tpu_custom_call.1']
    #allocation5 [shape = 'u8[1024]{0}', space=vmem, size = 0x400, scoped, tag = 'output window, operand 1, single buffered']
    #allocation6 [shape = 's32[1]{0}', space=sflag, size = 0x4, scoped, tag = 'scoped memory for tpu_custom_call.1']
    %14 = vsyncpa [#allocation4], 0
    %15 = vsyncpa [#allocation6], 0
    // Predicated region
    $region2: #{tpu_custom_call.1} parent=1 // pred_check
      _
    $region3: #{tpu_custom_call.1} parent=1 // pred_check_branch
      %17 = sbr.rel (0) target = $region5
    $region4: #{tpu_custom_call.1} parent=1 // pred_region
      _
    $region5: #{tpu_custom_call.1} parent=1 // pred_fallthru
      _
    // Predicated region
    $region6: #{tpu_custom_call.1} parent=1 // pred_check
      _
    $region7: #{tpu_custom_call.1} parent=1 // pred_check_branch
      %19 = sbr.rel (0) target = $region9
    $region8: #{tpu_custom_call.1} parent=1 // pred_region
      _
    $region9: #{tpu_custom_call.1} parent=1 // pred_fallthru
      _
    // Predicated region
    $region10: #{tpu_custom_call.1} parent=1 // pred_check
      _
    $region11: #{tpu_custom_call.1} parent=1 // pred_check_branch
      %21 = sbr.rel (0) target = $region13
    $region12: #{tpu_custom_call.1} parent=1 // pred_region
      _
    $region13: #{tpu_custom_call.1} parent=1 // pred_fallthru
      _
    // Predicated region
    $region14: #{tpu_custom_call.1} parent=1 // pred_check
      _
    $region15: #{tpu_custom_call.1} parent=1 // pred_check_branch
      %23 = sbr.rel (0) target = $region17
    $region16: #{tpu_custom_call.1} parent=1 // pred_region
      _
    $region17: #{tpu_custom_call.1} parent=1 // pred_fallthru
      _
    // Predicated region
    $region18: #{tpu_custom_call.1} parent=1 // pred_check
      _
    $region19: #{tpu_custom_call.1} parent=1 // pred_check_branch
      %25 = sbr.rel (0) target = $region21
    $region20: #{tpu_custom_call.1} parent=1 // pred_region
      _
    $region21: #{tpu_custom_call.1} parent=1 // pred_fallthru
      _
    // Predicated region
    $region22: #{tpu_custom_call.1} parent=1 // pred_check
      _
    $region23: #{tpu_custom_call.1} parent=1 // pred_check_branch
      %27 = sbr.rel (0) target = $region25
    $region24: #{tpu_custom_call.1} parent=1 // pred_region
      _
    $region25: #{tpu_custom_call.1} parent=1 // pred_fallthru
      _
    // Predicated region
    $region26: #{tpu_custom_call.1} parent=1 // pred_check
      _
    $region27: #{tpu_custom_call.1} parent=1 // pred_check_branch
      %29 = sbr.rel (0) target = $region29
    $region28: #{tpu_custom_call.1} parent=1 // pred_region
      _
    $region29: #{tpu_custom_call.1} parent=1 // pred_fallthru
      _
    %p30 = scmp.eq.s32.totalorder 0, 0
    // Predicated region
    $region30: #{tpu_custom_call.1} parent=1 // pred_check
      %p31 = pneg %p30
    $region31: #{tpu_custom_call.1} parent=1 // pred_check_branch
      %33 = sbr.rel (%p31) target = $region33
    $region32: #{tpu_custom_call.1} parent=1 // pred_region
      %vm34 = vcmask 523264
      %35 = vst.msk [vmem:[#allocation2] sm:$0xff] %vm34, 0.0
      %36 = vst.msk [vmem:[#allocation2 + $0x8] sm:$0xff] %vm34, 0.0
      %37 = vst.msk [vmem:[#allocation2 + $0x10] sm:$0xff] %vm34, 0.0
      %38 = vst.msk [vmem:[#allocation2 + $0x18] sm:$0xff] %vm34, 0.0
      %39 = vst.msk [vmem:[#allocation2 + $0x20] sm:$0xff] %vm34, 0.0
      %40 = vst.msk [vmem:[#allocation2 + $0x28] sm:$0xff] %vm34, 0.0
      %41 = vst.msk [vmem:[#allocation2 + $0x30] sm:$0xff] %vm34, 0.0
      %42 = vst.msk [vmem:[#allocation2 + $0x38] sm:$0xff] %vm34, 0.0
      %43 = vst.msk [vmem:[#allocation2 + $0x40] sm:$0xff] %vm34, 0.0
      %44 = vst.msk [vmem:[#allocation2 + $0x48] sm:$0xff] %vm34, 0.0
      %45 = vst.msk [vmem:[#allocation2 + $0x50] sm:$0xff] %vm34, 0.0
      %46 = vst.msk [vmem:[#allocation2 + $0x58] sm:$0xff] %vm34, 0.0
      %47 = vst.msk [vmem:[#allocation2 + $0x60] sm:$0xff] %vm34, 0.0
      %48 = vst.msk [vmem:[#allocation2 + $0x68] sm:$0xff] %vm34, 0.0
      %49 = vst.msk [vmem:[#allocation2 + $0x70] sm:$0xff] %vm34, 0.0
      %50 = vst.msk [vmem:[#allocation2 + $0x78] sm:$0xff] %vm34, 0.0
      %51 = vst.msk [vmem:[#allocation2 + $0x80] sm:$0xff] %vm34, 0.0
      %52 = vst.msk [vmem:[#allocation2 + $0x88] sm:$0xff] %vm34, 0.0
      %53 = vst.msk [vmem:[#allocation2 + $0x90] sm:$0xff] %vm34, 0.0
      %54 = vst.msk [vmem:[#allocation2 + $0x98] sm:$0xff] %vm34, 0.0
      %55 = vst.msk [vmem:[#allocation2 + $0xa0] sm:$0xff] %vm34, 0.0
      %56 = vst.msk [vmem:[#allocation2 + $0xa8] sm:$0xff] %vm34, 0.0
      %57 = vst.msk [vmem:[#allocation2 + $0xb0] sm:$0xff] %vm34, 0.0
      %58 = vst.msk [vmem:[#allocation2 + $0xb8] sm:$0xff] %vm34, 0.0
      %59 = vst.msk [vmem:[#allocation2 + $0xc0] sm:$0xff] %vm34, 0.0
      %60 = vst.msk [vmem:[#allocation2 + $0xc8] sm:$0xff] %vm34, 0.0
      %61 = vst.msk [vmem:[#allocation2 + $0xd0] sm:$0xff] %vm34, 0.0
      %62 = vst.msk [vmem:[#allocation2 + $0xd8] sm:$0xff] %vm34, 0.0
      %63 = vst.msk [vmem:[#allocation2 + $0xe0] sm:$0xff] %vm34, 0.0
      %64 = vst.msk [vmem:[#allocation2 + $0xe8] sm:$0xff] %vm34, 0.0
      %65 = vst.msk [vmem:[#allocation2 + $0xf0] sm:$0xff] %vm34, 0.0
      %66 = vst.msk [vmem:[#allocation2 + $0xf8] sm:$0xff] %vm34, 0.0
      %67 = vst.msk [vmem:[#allocation2 + $0x100] sm:$0xff] %vm34, 0.0
      %68 = vst.msk [vmem:[#allocation2 + $0x108] sm:$0xff] %vm34, 0.0
      %69 = vst.msk [vmem:[#allocation2 + $0x110] sm:$0xff] %vm34, 0.0
      %70 = vst.msk [vmem:[#allocation2 + $0x118] sm:$0xff] %vm34, 0.0
      %71 = vst.msk [vmem:[#allocation2 + $0x120] sm:$0xff] %vm34, 0.0
      %72 = vst.msk [vmem:[#allocation2 + $0x128] sm:$0xff] %vm34, 0.0
      %73 = vst.msk [vmem:[#allocation2 + $0x130] sm:$0xff] %vm34, 0.0
      %74 = vst.msk [vmem:[#allocation2 + $0x138] sm:$0xff] %vm34, 0.0
      %75 = vst.msk [vmem:[#allocation2 + $0x140] sm:$0xff] %vm34, 0.0
      %76 = vst.msk [vmem:[#allocation2 + $0x148] sm:$0xff] %vm34, 0.0
      %77 = vst.msk [vmem:[#allocation2 + $0x150] sm:$0xff] %vm34, 0.0
      %78 = vst.msk [vmem:[#allocation2 + $0x158] sm:$0xff] %vm34, 0.0
      %79 = vst.msk [vmem:[#allocation2 + $0x160] sm:$0xff] %vm34, 0.0
      %80 = vst.msk [vmem:[#allocation2 + $0x168] sm:$0xff] %vm34, 0.0
      %81 = vst.msk [vmem:[#allocation2 + $0x170] sm:$0xff] %vm34, 0.0
      %82 = vst.msk [vmem:[#allocation2 + $0x178] sm:$0xff] %vm34, 0.0
      %83 = vst.msk [vmem:[#allocation2 + $0x180] sm:$0xff] %vm34, 0.0
      %84 = vst.msk [vmem:[#allocation2 + $0x188] sm:$0xff] %vm34, 0.0
      %85 = vst.msk [vmem:[#allocation2 + $0x190] sm:$0xff] %vm34, 0.0
      %86 = vst.msk [vmem:[#allocation2 + $0x198] sm:$0xff] %vm34, 0.0
      %87 = vst.msk [vmem:[#allocation2 + $0x1a0] sm:$0xff] %vm34, 0.0
      %88 = vst.msk [vmem:[#allocation2 + $0x1a8] sm:$0xff] %vm34, 0.0
      %89 = vst.msk [vmem:[#allocation2 + $0x1b0] sm:$0xff] %vm34, 0.0
      %90 = vst.msk [vmem:[#allocation2 + $0x1b8] sm:$0xff] %vm34, 0.0
      %91 = vst.msk [vmem:[#allocation2 + $0x1c0] sm:$0xff] %vm34, 0.0
      %92 = vst.msk [vmem:[#allocation2 + $0x1c8] sm:$0xff] %vm34, 0.0
      %93 = vst.msk [vmem:[#allocation2 + $0x1d0] sm:$0xff] %vm34, 0.0
      %94 = vst.msk [vmem:[#allocation2 + $0x1d8] sm:$0xff] %vm34, 0.0
      %95 = vst.msk [vmem:[#allocation2 + $0x1e0] sm:$0xff] %vm34, 0.0
      %96 = vst.msk [vmem:[#allocation2 + $0x1e8] sm:$0xff] %vm34, 0.0
      %97 = vst.msk [vmem:[#allocation2 + $0x1f0] sm:$0xff] %vm34, 0.0
      %98 = vst.msk [vmem:[#allocation2 + $0x1f8] sm:$0xff] %vm34, 0.0
    $region33: #{tpu_custom_call.1} parent=1 // pred_fallthru
      _
    %v99 = vld [vmem:[%s0] sm:$0xff]
    %v100 = vld [vmem:[%s0 + $0x8] sm:$0xff]
    %v101 = vld [vmem:[%s0 + $0x10] sm:$0xff]
    %v102 = vld [vmem:[%s0 + $0x18] sm:$0xff]
    %v103 = vld [vmem:[%s0 + $0x20] sm:$0xff]
    %v104 = vld [vmem:[%s0 + $0x28] sm:$0xff]
    %v105 = vld [vmem:[%s0 + $0x30] sm:$0xff]
    %v106 = vld [vmem:[%s0 + $0x38] sm:$0xff]
    %v107 = vld [vmem:[%s0 + $0x40] sm:$0xff]
    %v108 = vld [vmem:[%s0 + $0x48] sm:$0xff]
    %v109 = vld [vmem:[%s0 + $0x50] sm:$0xff]
    %v110 = vld [vmem:[%s0 + $0x58] sm:$0xff]
    %v111 = vld [vmem:[%s0 + $0x60] sm:$0xff]
    %v112 = vld [vmem:[%s0 + $0x68] sm:$0xff]
    %v113 = vld [vmem:[%s0 + $0x70] sm:$0xff]
    %v114 = vld [vmem:[%s0 + $0x78] sm:$0xff]
    %v115 = vld [vmem:[%s0 + $0x80] sm:$0xff]
    %v116 = vld [vmem:[%s0 + $0x88] sm:$0xff]
    %v117 = vld [vmem:[%s0 + $0x90] sm:$0xff]
    %v118 = vld [vmem:[%s0 + $0x98] sm:$0xff]
    %v119 = vld [vmem:[%s0 + $0xa0] sm:$0xff]
    %v120 = vld [vmem:[%s0 + $0xa8] sm:$0xff]
    %v121 = vld [vmem:[%s0 + $0xb0] sm:$0xff]
    %v122 = vld [vmem:[%s0 + $0xb8] sm:$0xff]
    %v123 = vld [vmem:[%s0 + $0xc0] sm:$0xff]
    %v124 = vld [vmem:[%s0 + $0xc8] sm:$0xff]
    %v125 = vld [vmem:[%s0 + $0xd0] sm:$0xff]
    %v126 = vld [vmem:[%s0 + $0xd8] sm:$0xff]
    %v127 = vld [vmem:[%s0 + $0xe0] sm:$0xff]
    %v128 = vld [vmem:[%s0 + $0xe8] sm:$0xff]
    %v129 = vld [vmem:[%s0 + $0xf0] sm:$0xff]
    %v130 = vld [vmem:[%s0 + $0xf8] sm:$0xff]
    %v131 = vld [vmem:[%s0 + $0x100] sm:$0xff]
    %v132 = vld [vmem:[%s0 + $0x108] sm:$0xff]
    %v133 = vld [vmem:[%s0 + $0x110] sm:$0xff]
    %v134 = vld [vmem:[%s0 + $0x118] sm:$0xff]
    %v135 = vld [vmem:[%s0 + $0x120] sm:$0xff]
    %v136 = vld [vmem:[%s0 + $0x128] sm:$0xff]
    %v137 = vld [vmem:[%s0 + $0x130] sm:$0xff]
    %v138 = vld [vmem:[%s0 + $0x138] sm:$0xff]
    %v139 = vld [vmem:[%s0 + $0x140] sm:$0xff]
    %v140 = vld [vmem:[%s0 + $0x148] sm:$0xff]
    %v141 = vld [vmem:[%s0 + $0x150] sm:$0xff]
    %v142 = vld [vmem:[%s0 + $0x158] sm:$0xff]
    %v143 = vld [vmem:[%s0 + $0x160] sm:$0xff]
    %v144 = vld [vmem:[%s0 + $0x168] sm:$0xff]
    %v145 = vld [vmem:[%s0 + $0x170] sm:$0xff]
    %v146 = vld [vmem:[%s0 + $0x178] sm:$0xff]
    %v147 = vld [vmem:[%s0 + $0x180] sm:$0xff]
    %v148 = vld [vmem:[%s0 + $0x188] sm:$0xff]
    %v149 = vld [vmem:[%s0 + $0x190] sm:$0xff]
    %v150 = vld [vmem:[%s0 + $0x198] sm:$0xff]
    %v151 = vld [vmem:[%s0 + $0x1a0] sm:$0xff]
    %v152 = vld [vmem:[%s0 + $0x1a8] sm:$0xff]
    %v153 = vld [vmem:[%s0 + $0x1b0] sm:$0xff]
    %v154 = vld [vmem:[%s0 + $0x1b8] sm:$0xff]
    %v155 = vld [vmem:[%s0 + $0x1c0] sm:$0xff]
    %v156 = vld [vmem:[%s0 + $0x1c8] sm:$0xff]
    %v157 = vld [vmem:[%s0 + $0x1d0] sm:$0xff]
    %v158 = vld [vmem:[%s0 + $0x1d8] sm:$0xff]
    %v159 = vld [vmem:[%s0 + $0x1e0] sm:$0xff]
    %v160 = vld [vmem:[%s0 + $0x1e8] sm:$0xff]
    %v161 = vld [vmem:[%s0 + $0x1f0] sm:$0xff]
    %v162 = vld [vmem:[%s0 + $0x1f8] sm:$0xff]
    %v163 = vld [vmem:[#allocation2] sm:$0xff]
    %v164 = vld [vmem:[#allocation2 + $0x8] sm:$0xff]
    %v165 = vld [vmem:[#allocation2 + $0x10] sm:$0xff]
    %v166 = vld [vmem:[#allocation2 + $0x18] sm:$0xff]
    %v167 = vld [vmem:[#allocation2 + $0x20] sm:$0xff]
    %v168 = vld [vmem:[#allocation2 + $0x28] sm:$0xff]
    %v169 = vld [vmem:[#allocation2 + $0x30] sm:$0xff]
    %v170 = vld [vmem:[#allocation2 + $0x38] sm:$0xff]
    %v171 = vld [vmem:[#allocation2 + $0x40] sm:$0xff]
    %v172 = vld [vmem:[#allocation2 + $0x48] sm:$0xff]
    %v173 = vld [vmem:[#allocation2 + $0x50] sm:$0xff]
    %v174 = vld [vmem:[#allocation2 + $0x58] sm:$0xff]
    %v175 = vld [vmem:[#allocation2 + $0x60] sm:$0xff]
    %v176 = vld [vmem:[#allocation2 + $0x68] sm:$0xff]
    %v177 = vld [vmem:[#allocation2 + $0x70] sm:$0xff]
    %v178 = vld [vmem:[#allocation2 + $0x78] sm:$0xff]
    %v179 = vld [vmem:[#allocation2 + $0x80] sm:$0xff]
    %v180 = vld [vmem:[#allocation2 + $0x88] sm:$0xff]
    %v181 = vld [vmem:[#allocation2 + $0x90] sm:$0xff]
    %v182 = vld [vmem:[#allocation2 + $0x98] sm:$0xff]
    %v183 = vld [vmem:[#allocation2 + $0xa0] sm:$0xff]
    %v184 = vld [vmem:[#allocation2 + $0xa8] sm:$0xff]
    %v185 = vld [vmem:[#allocation2 + $0xb0] sm:$0xff]
    %v186 = vld [vmem:[#allocation2 + $0xb8] sm:$0xff]
    %v187 = vld [vmem:[#allocation2 + $0xc0] sm:$0xff]
    %v188 = vld [vmem:[#allocation2 + $0xc8] sm:$0xff]
    %v189 = vld [vmem:[#allocation2 + $0xd0] sm:$0xff]
    %v190 = vld [vmem:[#allocation2 + $0xd8] sm:$0xff]
    %v191 = vld [vmem:[#allocation2 + $0xe0] sm:$0xff]
    %v192 = vld [vmem:[#allocation2 + $0xe8] sm:$0xff]
    %v193 = vld [vmem:[#allocation2 + $0xf0] sm:$0xff]
    %v194 = vld [vmem:[#allocation2 + $0xf8] sm:$0xff]
    %v195 = vld [vmem:[#allocation2 + $0x100] sm:$0xff]
    %v196 = vld [vmem:[#allocation2 + $0x108] sm:$0xff]
    %v197 = vld [vmem:[#allocation2 + $0x110] sm:$0xff]
    %v198 = vld [vmem:[#allocation2 + $0x118] sm:$0xff]
    %v199 = vld [vmem:[#allocation2 + $0x120] sm:$0xff]
    %v200 = vld [vmem:[#allocation2 + $0x128] sm:$0xff]
    %v201 = vld [vmem:[#allocation2 + $0x130] sm:$0xff]
    %v202 = vld [vmem:[#allocation2 + $0x138] sm:$0xff]
    %v203 = vld [vmem:[#allocation2 + $0x140] sm:$0xff]
    %v204 = vld [vmem:[#allocation2 + $0x148] sm:$0xff]
    %v205 = vld [vmem:[#allocation2 + $0x150] sm:$0xff]
    %v206 = vld [vmem:[#allocation2 + $0x158] sm:$0xff]
    %v207 = vld [vmem:[#allocation2 + $0x160] sm:$0xff]
    %v208 = vld [vmem:[#allocation2 + $0x168] sm:$0xff]
    %v209 = vld [vmem:[#allocation2 + $0x170] sm:$0xff]
    %v210 = vld [vmem:[#allocation2 + $0x178] sm:$0xff]
    %v211 = vld [vmem:[#allocation2 + $0x180] sm:$0xff]
    %v212 = vld [vmem:[#allocation2 + $0x188] sm:$0xff]
    %v213 = vld [vmem:[#allocation2 + $0x190] sm:$0xff]
    %v214 = vld [vmem:[#allocation2 + $0x198] sm:$0xff]
    %v215 = vld [vmem:[#allocation2 + $0x1a0] sm:$0xff]
    %v216 = vld [vmem:[#allocation2 + $0x1a8] sm:$0xff]
    %v217 = vld [vmem:[#allocation2 + $0x1b0] sm:$0xff]
    %v218 = vld [vmem:[#allocation2 + $0x1b8] sm:$0xff]
    %v219 = vld [vmem:[#allocation2 + $0x1c0] sm:$0xff]
    %v220 = vld [vmem:[#allocation2 + $0x1c8] sm:$0xff]
    %v221 = vld [vmem:[#allocation2 + $0x1d0] sm:$0xff]
    %v222 = vld [vmem:[#allocation2 + $0x1d8] sm:$0xff]
    %v223 = vld [vmem:[#allocation2 + $0x1e0] sm:$0xff]
    %v224 = vld [vmem:[#allocation2 + $0x1e8] sm:$0xff]
    %v225 = vld [vmem:[#allocation2 + $0x1f0] sm:$0xff]
    %v226 = vld [vmem:[#allocation2 + $0x1f8] sm:$0xff]
    %v227 = vadd.f32 %v163, %v99
    %v228 = vadd.f32 %v164, %v100
    %v229 = vadd.f32 %v165, %v101
    %v230 = vadd.f32 %v166, %v102
    %v231 = vadd.f32 %v167, %v103
    %v232 = vadd.f32 %v168, %v104
    %v233 = vadd.f32 %v169, %v105
    %v234 = vadd.f32 %v170, %v106
    %v235 = vadd.f32 %v171, %v107
    %v236 = vadd.f32 %v172, %v108
    %v237 = vadd.f32 %v173, %v109
    %v238 = vadd.f32 %v174, %v110
    %v239 = vadd.f32 %v175, %v111
    %v240 = vadd.f32 %v176, %v112
    %v241 = vadd.f32 %v177, %v113
    %v242 = vadd.f32 %v178, %v114
    %v243 = vadd.f32 %v179, %v115
    %v244 = vadd.f32 %v180, %v116
    %v245 = vadd.f32 %v181, %v117
    %v246 = vadd.f32 %v182, %v118
    %v247 = vadd.f32 %v183, %v119
    %v248 = vadd.f32 %v184, %v120
    %v249 = vadd.f32 %v185, %v121
    %v250 = vadd.f32 %v186, %v122
    %v251 = vadd.f32 %v187, %v123
    %v252 = vadd.f32 %v188, %v124
    %v253 = vadd.f32 %v189, %v125
    %v254 = vadd.f32 %v190, %v126
    %v255 = vadd.f32 %v191, %v127
    %v256 = vadd.f32 %v192, %v128
    %v257 = vadd.f32 %v193, %v129
    %v258 = vadd.f32 %v194, %v130
    %v259 = vadd.f32 %v195, %v131
    %v260 = vadd.f32 %v196, %v132
    %v261 = vadd.f32 %v197, %v133
    %v262 = vadd.f32 %v198, %v134
    %v263 = vadd.f32 %v199, %v135
    %v264 = vadd.f32 %v200, %v136
    %v265 = vadd.f32 %v201, %v137
    %v266 = vadd.f32 %v202, %v138
    %v267 = vadd.f32 %v203, %v139
    %v268 = vadd.f32 %v204, %v140
    %v269 = vadd.f32 %v205, %v141
    %v270 = vadd.f32 %v206, %v142
    %v271 = vadd.f32 %v207, %v143
    %v272 = vadd.f32 %v208, %v144
    %v273 = vadd.f32 %v209, %v145
    %v274 = vadd.f32 %v210, %v146
    %v275 = vadd.f32 %v211, %v147
    %v276 = vadd.f32 %v212, %v148
    %v277 = vadd.f32 %v213, %v149
    %v278 = vadd.f32 %v214, %v150
    %v279 = vadd.f32 %v215, %v151
    %v280 = vadd.f32 %v216, %v152
    %v281 = vadd.f32 %v217, %v153
    %v282 = vadd.f32 %v218, %v154
    %v283 = vadd.f32 %v219, %v155
    %v284 = vadd.f32 %v220, %v156
    %v285 = vadd.f32 %v221, %v157
    %v286 = vadd.f32 %v222, %v158
    %v287 = vadd.f32 %v223, %v159
    %v288 = vadd.f32 %v224, %v160
    %v289 = vadd.f32 %v225, %v161
    %v290 = vadd.f32 %v226, %v162
    %vm291 = vcmask 523264
    %292 = vst.msk [vmem:[#allocation2] sm:$0xff] %vm291, %v227
    %293 = vst.msk [vmem:[#allocation2 + $0x8] sm:$0xff] %vm291, %v228
    %294 = vst.msk [vmem:[#allocation2 + $0x10] sm:$0xff] %vm291, %v229
    %295 = vst.msk [vmem:[#allocation2 + $0x18] sm:$0xff] %vm291, %v230
    %296 = vst.msk [vmem:[#allocation2 + $0x20] sm:$0xff] %vm291, %v231
    %297 = vst.msk [vmem:[#allocation2 + $0x28] sm:$0xff] %vm291, %v232
    %298 = vst.msk [vmem:[#allocation2 + $0x30] sm:$0xff] %vm291, %v233
    %299 = vst.msk [vmem:[#allocation2 + $0x38] sm:$0xff] %vm291, %v234
    %300 = vst.msk [vmem:[#allocation2 + $0x40] sm:$0xff] %vm291, %v235
    %301 = vst.msk [vmem:[#allocation2 + $0x48] sm:$0xff] %vm291, %v236
    %302 = vst.msk [vmem:[#allocation2 + $0x50] sm:$0xff] %vm291, %v237
    %303 = vst.msk [vmem:[#allocation2 + $0x58] sm:$0xff] %vm291, %v238
    %304 = vst.msk [vmem:[#allocation2 + $0x60] sm:$0xff] %vm291, %v239
    %305 = vst.msk [vmem:[#allocation2 + $0x68] sm:$0xff] %vm291, %v240
    %306 = vst.msk [vmem:[#allocation2 + $0x70] sm:$0xff] %vm291, %v241
    %307 = vst.msk [vmem:[#allocation2 + $0x78] sm:$0xff] %vm291, %v242
    %308 = vst.msk [vmem:[#allocation2 + $0x80] sm:$0xff] %vm291, %v243
    %309 = vst.msk [vmem:[#allocation2 + $0x88] sm:$0xff] %vm291, %v244
    %310 = vst.msk [vmem:[#allocation2 + $0x90] sm:$0xff] %vm291, %v245
    %311 = vst.msk [vmem:[#allocation2 + $0x98] sm:$0xff] %vm291, %v246
    %312 = vst.msk [vmem:[#allocation2 + $0xa0] sm:$0xff] %vm291, %v247
    %313 = vst.msk [vmem:[#allocation2 + $0xa8] sm:$0xff] %vm291, %v248
    %314 = vst.msk [vmem:[#allocation2 + $0xb0] sm:$0xff] %vm291, %v249
    %315 = vst.msk [vmem:[#allocation2 + $0xb8] sm:$0xff] %vm291, %v250
    %316 = vst.msk [vmem:[#allocation2 + $0xc0] sm:$0xff] %vm291, %v251
    %317 = vst.msk [vmem:[#allocation2 + $0xc8] sm:$0xff] %vm291, %v252
    %318 = vst.msk [vmem:[#allocation2 + $0xd0] sm:$0xff] %vm291, %v253
    %319 = vst.msk [vmem:[#allocation2 + $0xd8] sm:$0xff] %vm291, %v254
    %320 = vst.msk [vmem:[#allocation2 + $0xe0] sm:$0xff] %vm291, %v255
    %321 = vst.msk [vmem:[#allocation2 + $0xe8] sm:$0xff] %vm291, %v256
    %322 = vst.msk [vmem:[#allocation2 + $0xf0] sm:$0xff] %vm291, %v257
    %323 = vst.msk [vmem:[#allocation2 + $0xf8] sm:$0xff] %vm291, %v258
    %324 = vst.msk [vmem:[#allocation2 + $0x100] sm:$0xff] %vm291, %v259
    %325 = vst.msk [vmem:[#allocation2 + $0x108] sm:$0xff] %vm291, %v260
    %326 = vst.msk [vmem:[#allocation2 + $0x110] sm:$0xff] %vm291, %v261
    %327 = vst.msk [vmem:[#allocation2 + $0x118] sm:$0xff] %vm291, %v262
    %328 = vst.msk [vmem:[#allocation2 + $0x120] sm:$0xff] %vm291, %v263
    %329 = vst.msk [vmem:[#allocation2 + $0x128] sm:$0xff] %vm291, %v264
    %330 = vst.msk [vmem:[#allocation2 + $0x130] sm:$0xff] %vm291, %v265
    %331 = vst.msk [vmem:[#allocation2 + $0x138] sm:$0xff] %vm291, %v266
    %332 = vst.msk [vmem:[#allocation2 + $0x140] sm:$0xff] %vm291, %v267
    %333 = vst.msk [vmem:[#allocation2 + $0x148] sm:$0xff] %vm291, %v268
    %334 = vst.msk [vmem:[#allocation2 + $0x150] sm:$0xff] %vm291, %v269
    %335 = vst.msk [vmem:[#allocation2 + $0x158] sm:$0xff] %vm291, %v270
    %336 = vst.msk [vmem:[#allocation2 + $0x160] sm:$0xff] %vm291, %v271
    %337 = vst.msk [vmem:[#allocation2 + $0x168] sm:$0xff] %vm291, %v272
    %338 = vst.msk [vmem:[#allocation2 + $0x170] sm:$0xff] %vm291, %v273
    %339 = vst.msk [vmem:[#allocation2 + $0x178] sm:$0xff] %vm291, %v274
    %340 = vst.msk [vmem:[#allocation2 + $0x180] sm:$0xff] %vm291, %v275
    %341 = vst.msk [vmem:[#allocation2 + $0x188] sm:$0xff] %vm291, %v276
    %342 = vst.msk [vmem:[#allocation2 + $0x190] sm:$0xff] %vm291, %v277
    %343 = vst.msk [vmem:[#allocation2 + $0x198] sm:$0xff] %vm291, %v278
    %344 = vst.msk [vmem:[#allocation2 + $0x1a0] sm:$0xff] %vm291, %v279
    %345 = vst.msk [vmem:[#allocation2 + $0x1a8] sm:$0xff] %vm291, %v280
    %346 = vst.msk [vmem:[#allocation2 + $0x1b0] sm:$0xff] %vm291, %v281
    %347 = vst.msk [vmem:[#allocation2 + $0x1b8] sm:$0xff] %vm291, %v282
    %348 = vst.msk [vmem:[#allocation2 + $0x1c0] sm:$0xff] %vm291, %v283
    %349 = vst.msk [vmem:[#allocation2 + $0x1c8] sm:$0xff] %vm291, %v284
    %350 = vst.msk [vmem:[#allocation2 + $0x1d0] sm:$0xff] %vm291, %v285
    %351 = vst.msk [vmem:[#allocation2 + $0x1d8] sm:$0xff] %vm291, %v286
    %352 = vst.msk [vmem:[#allocation2 + $0x1e0] sm:$0xff] %vm291, %v287
    %353 = vst.msk [vmem:[#allocation2 + $0x1e8] sm:$0xff] %vm291, %v288
    %354 = vst.msk [vmem:[#allocation2 + $0x1f0] sm:$0xff] %vm291, %v289
    %355 = vst.msk [vmem:[#allocation2 + $0x1f8] sm:$0xff] %vm291, %v290
    // Predicated region
    $region34: #{tpu_custom_call.1} parent=1 // pred_check
      %p356 = pneg %p30
    $region35: #{tpu_custom_call.1} parent=1 // pred_check_branch
      %358 = sbr.rel (%p356) target = $region37
    $region36: #{tpu_custom_call.1} parent=1 // pred_region
      %v359 = vld [vmem:[#allocation2] sm:$0xff]
      %v360 = vld [vmem:[#allocation2 + $0x8] sm:$0xff]
      %v361 = vld [vmem:[#allocation2 + $0x10] sm:$0xff]
      %v362 = vld [vmem:[#allocation2 + $0x18] sm:$0xff]
      %v363 = vld [vmem:[#allocation2 + $0x20] sm:$0xff]
      %v364 = vld [vmem:[#allocation2 + $0x28] sm:$0xff]
      %v365 = vld [vmem:[#allocation2 + $0x30] sm:$0xff]
      %v366 = vld [vmem:[#allocation2 + $0x38] sm:$0xff]
      %v367 = vld [vmem:[#allocation2 + $0x40] sm:$0xff]
      %v368 = vld [vmem:[#allocation2 + $0x48] sm:$0xff]
      %v369 = vld [vmem:[#allocation2 + $0x50] sm:$0xff]
      %v370 = vld [vmem:[#allocation2 + $0x58] sm:$0xff]
      %v371 = vld [vmem:[#allocation2 + $0x60] sm:$0xff]
      %v372 = vld [vmem:[#allocation2 + $0x68] sm:$0xff]
      %v373 = vld [vmem:[#allocation2 + $0x70] sm:$0xff]
      %v374 = vld [vmem:[#allocation2 + $0x78] sm:$0xff]
      %v375 = vld [vmem:[#allocation2 + $0x80] sm:$0xff]
      %v376 = vld [vmem:[#allocation2 + $0x88] sm:$0xff]
      %v377 = vld [vmem:[#allocation2 + $0x90] sm:$0xff]
      %v378 = vld [vmem:[#allocation2 + $0x98] sm:$0xff]
      %v379 = vld [vmem:[#allocation2 + $0xa0] sm:$0xff]
      %v380 = vld [vmem:[#allocation2 + $0xa8] sm:$0xff]
      %v381 = vld [vmem:[#allocation2 + $0xb0] sm:$0xff]
      %v382 = vld [vmem:[#allocation2 + $0xb8] sm:$0xff]
      %v383 = vld [vmem:[#allocation2 + $0xc0] sm:$0xff]
      %v384 = vld [vmem:[#allocation2 + $0xc8] sm:$0xff]
      %v385 = vld [vmem:[#allocation2 + $0xd0] sm:$0xff]
      %v386 = vld [vmem:[#allocation2 + $0xd8] sm:$0xff]
      %v387 = vld [vmem:[#allocation2 + $0xe0] sm:$0xff]
      %v388 = vld [vmem:[#allocation2 + $0xe8] sm:$0xff]
      %v389 = vld [vmem:[#allocation2 + $0xf0] sm:$0xff]
      %v390 = vld [vmem:[#allocation2 + $0xf8] sm:$0xff]
      %v391 = vld [vmem:[#allocation2 + $0x100] sm:$0xff]
      %v392 = vld [vmem:[#allocation2 + $0x108] sm:$0xff]
      %v393 = vld [vmem:[#allocation2 + $0x110] sm:$0xff]
      %v394 = vld [vmem:[#allocation2 + $0x118] sm:$0xff]
      %v395 = vld [vmem:[#allocation2 + $0x120] sm:$0xff]
      %v396 = vld [vmem:[#allocation2 + $0x128] sm:$0xff]
      %v397 = vld [vmem:[#allocation2 + $0x130] sm:$0xff]
      %v398 = vld [vmem:[#allocation2 + $0x138] sm:$0xff]
      %v399 = vld [vmem:[#allocation2 + $0x140] sm:$0xff]
      %v400 = vld [vmem:[#allocation2 + $0x148] sm:$0xff]
      %v401 = vld [vmem:[#allocation2 + $0x150] sm:$0xff]
      %v402 = vld [vmem:[#allocation2 + $0x158] sm:$0xff]
      %v403 = vld [vmem:[#allocation2 + $0x160] sm:$0xff]
      %v404 = vld [vmem:[#allocation2 + $0x168] sm:$0xff]
      %v405 = vld [vmem:[#allocation2 + $0x170] sm:$0xff]
      %v406 = vld [vmem:[#allocation2 + $0x178] sm:$0xff]
      %v407 = vld [vmem:[#allocation2 + $0x180] sm:$0xff]
      %v408 = vld [vmem:[#allocation2 + $0x188] sm:$0xff]
      %v409 = vld [vmem:[#allocation2 + $0x190] sm:$0xff]
      %v410 = vld [vmem:[#allocation2 + $0x198] sm:$0xff]
      %v411 = vld [vmem:[#allocation2 + $0x1a0] sm:$0xff]
      %v412 = vld [vmem:[#allocation2 + $0x1a8] sm:$0xff]
      %v413 = vld [vmem:[#allocation2 + $0x1b0] sm:$0xff]
      %v414 = vld [vmem:[#allocation2 + $0x1b8] sm:$0xff]
      %v415 = vld [vmem:[#allocation2 + $0x1c0] sm:$0xff]
      %v416 = vld [vmem:[#allocation2 + $0x1c8] sm:$0xff]
      %v417 = vld [vmem:[#allocation2 + $0x1d0] sm:$0xff]
      %v418 = vld [vmem:[#allocation2 + $0x1d8] sm:$0xff]
      %v419 = vld [vmem:[#allocation2 + $0x1e0] sm:$0xff]
      %v420 = vld [vmem:[#allocation2 + $0x1e8] sm:$0xff]
      %v421 = vld [vmem:[#allocation2 + $0x1f0] sm:$0xff]
      %v422 = vld [vmem:[#allocation2 + $0x1f8] sm:$0xff]
      %v423 = vsel %vm291, %v359, 0.0
      %424 = vadd.xlane.f32.xlu0 %v423
      %v425 = vpop.xlane.xlu0 %424
      %v426 = vsel %vm291, %v360, 0.0
      %427 = vadd.xlane.f32.xlu0 %v426
      %v428 = vpop.xlane.xlu0 %427
      %v429 = vsel %vm291, %v361, 0.0
      %430 = vadd.xlane.f32.xlu0 %v429
      %v431 = vpop.xlane.xlu0 %430
      %v432 = vsel %vm291, %v362, 0.0
      %433 = vadd.xlane.f32.xlu0 %v432
      %v434 = vpop.xlane.xlu0 %433
      %v435 = vsel %vm291, %v363, 0.0
      %436 = vadd.xlane.f32.xlu0 %v435
      %v437 = vpop.xlane.xlu0 %436
      %v438 = vsel %vm291, %v364, 0.0
      %439 = vadd.xlane.f32.xlu0 %v438
      %v440 = vpop.xlane.xlu0 %439
      %v441 = vsel %vm291, %v365, 0.0
      %442 = vadd.xlane.f32.xlu0 %v441
      %v443 = vpop.xlane.xlu0 %442
      %v444 = vsel %vm291, %v366, 0.0
      %445 = vadd.xlane.f32.xlu0 %v444
      %v446 = vpop.xlane.xlu0 %445
      %v447 = vsel %vm291, %v367, 0.0
      %448 = vadd.xlane.f32.xlu0 %v447
      %v449 = vpop.xlane.xlu0 %448
      %v450 = vsel %vm291, %v368, 0.0
      %451 = vadd.xlane.f32.xlu0 %v450
      %v452 = vpop.xlane.xlu0 %451
      %v453 = vsel %vm291, %v369, 0.0
      %454 = vadd.xlane.f32.xlu0 %v453
      %v455 = vpop.xlane.xlu0 %454
      %v456 = vsel %vm291, %v370, 0.0
      %457 = vadd.xlane.f32.xlu0 %v456
      %v458 = vpop.xlane.xlu0 %457
      %v459 = vsel %vm291, %v371, 0.0
      %460 = vadd.xlane.f32.xlu0 %v459
      %v461 = vpop.xlane.xlu0 %460
      %v462 = vsel %vm291, %v372, 0.0
      %463 = vadd.xlane.f32.xlu0 %v462
      %v464 = vpop.xlane.xlu0 %463
      %v465 = vsel %vm291, %v373, 0.0
      %466 = vadd.xlane.f32.xlu0 %v465
      %v467 = vpop.xlane.xlu0 %466
      %v468 = vsel %vm291, %v374, 0.0
      %469 = vadd.xlane.f32.xlu0 %v468
      %v470 = vpop.xlane.xlu0 %469
      %v471 = vsel %vm291, %v375, 0.0
      %472 = vadd.xlane.f32.xlu0 %v471
      %v473 = vpop.xlane.xlu0 %472
      %v474 = vsel %vm291, %v376, 0.0
      %475 = vadd.xlane.f32.xlu0 %v474
      %v476 = vpop.xlane.xlu0 %475
      %v477 = vsel %vm291, %v377, 0.0
      %478 = vadd.xlane.f32.xlu0 %v477
      %v479 = vpop.xlane.xlu0 %478
      %v480 = vsel %vm291, %v378, 0.0
      %481 = vadd.xlane.f32.xlu0 %v480
      %v482 = vpop.xlane.xlu0 %481
      %v483 = vsel %vm291, %v379, 0.0
      %484 = vadd.xlane.f32.xlu0 %v483
      %v485 = vpop.xlane.xlu0 %484
      %v486 = vsel %vm291, %v380, 0.0
      %487 = vadd.xlane.f32.xlu0 %v486
      %v488 = vpop.xlane.xlu0 %487
      %v489 = vsel %vm291, %v381, 0.0
      %490 = vadd.xlane.f32.xlu0 %v489
      %v491 = vpop.xlane.xlu0 %490
      %v492 = vsel %vm291, %v382, 0.0
      %493 = vadd.xlane.f32.xlu0 %v492
      %v494 = vpop.xlane.xlu0 %493
      %v495 = vsel %vm291, %v383, 0.0
      %496 = vadd.xlane.f32.xlu0 %v495
      %v497 = vpop.xlane.xlu0 %496
      %v498 = vsel %vm291, %v384, 0.0
      %499 = vadd.xlane.f32.xlu0 %v498
      %v500 = vpop.xlane.xlu0 %499
      %v501 = vsel %vm291, %v385, 0.0
      %502 = vadd.xlane.f32.xlu0 %v501
      %v503 = vpop.xlane.xlu0 %502
      %v504 = vsel %vm291, %v386, 0.0
      %505 = vadd.xlane.f32.xlu0 %v504
      %v506 = vpop.xlane.xlu0 %505
      %v507 = vsel %vm291, %v387, 0.0
      %508 = vadd.xlane.f32.xlu0 %v507
      %v509 = vpop.xlane.xlu0 %508
      %v510 = vsel %vm291, %v388, 0.0
      %511 = vadd.xlane.f32.xlu0 %v510
      %v512 = vpop.xlane.xlu0 %511
      %v513 = vsel %vm291, %v389, 0.0
      %514 = vadd.xlane.f32.xlu0 %v513
      %v515 = vpop.xlane.xlu0 %514
      %v516 = vsel %vm291, %v390, 0.0
      %517 = vadd.xlane.f32.xlu0 %v516
      %v518 = vpop.xlane.xlu0 %517
      %v519 = vsel %vm291, %v391, 0.0
      %520 = vadd.xlane.f32.xlu0 %v519
      %v521 = vpop.xlane.xlu0 %520
      %v522 = vsel %vm291, %v392, 0.0
      %523 = vadd.xlane.f32.xlu0 %v522
      %v524 = vpop.xlane.xlu0 %523
      %v525 = vsel %vm291, %v393, 0.0
      %526 = vadd.xlane.f32.xlu0 %v525
      %v527 = vpop.xlane.xlu0 %526
      %v528 = vsel %vm291, %v394, 0.0
      %529 = vadd.xlane.f32.xlu0 %v528
      %v530 = vpop.xlane.xlu0 %529
      %v531 = vsel %vm291, %v395, 0.0
      %532 = vadd.xlane.f32.xlu0 %v531
      %v533 = vpop.xlane.xlu0 %532
      %v534 = vsel %vm291, %v396, 0.0
      %535 = vadd.xlane.f32.xlu0 %v534
      %v536 = vpop.xlane.xlu0 %535
      %v537 = vsel %vm291, %v397, 0.0
      %538 = vadd.xlane.f32.xlu0 %v537
      %v539 = vpop.xlane.xlu0 %538
      %v540 = vsel %vm291, %v398, 0.0
      %541 = vadd.xlane.f32.xlu0 %v540
      %v542 = vpop.xlane.xlu0 %541
      %v543 = vsel %vm291, %v399, 0.0
      %544 = vadd.xlane.f32.xlu0 %v543
      %v545 = vpop.xlane.xlu0 %544
      %v546 = vsel %vm291, %v400, 0.0
      %547 = vadd.xlane.f32.xlu0 %v546
      %v548 = vpop.xlane.xlu0 %547
      %v549 = vsel %vm291, %v401, 0.0
      %550 = vadd.xlane.f32.xlu0 %v549
      %v551 = vpop.xlane.xlu0 %550
      %v552 = vsel %vm291, %v402, 0.0
      %553 = vadd.xlane.f32.xlu0 %v552
      %v554 = vpop.xlane.xlu0 %553
      %v555 = vsel %vm291, %v403, 0.0
      %556 = vadd.xlane.f32.xlu0 %v555
      %v557 = vpop.xlane.xlu0 %556
      %v558 = vsel %vm291, %v404, 0.0
      %559 = vadd.xlane.f32.xlu0 %v558
      %v560 = vpop.xlane.xlu0 %559
      %v561 = vsel %vm291, %v405, 0.0
      %562 = vadd.xlane.f32.xlu0 %v561
      %v563 = vpop.xlane.xlu0 %562
      %v564 = vsel %vm291, %v406, 0.0
      %565 = vadd.xlane.f32.xlu0 %v564
      %v566 = vpop.xlane.xlu0 %565
      %v567 = vsel %vm291, %v407, 0.0
      %568 = vadd.xlane.f32.xlu0 %v567
      %v569 = vpop.xlane.xlu0 %568
      %v570 = vsel %vm291, %v408, 0.0
      %571 = vadd.xlane.f32.xlu0 %v570
      %v572 = vpop.xlane.xlu0 %571
      %v573 = vsel %vm291, %v409, 0.0
      %574 = vadd.xlane.f32.xlu0 %v573
      %v575 = vpop.xlane.xlu0 %574
      %v576 = vsel %vm291, %v410, 0.0
      %577 = vadd.xlane.f32.xlu0 %v576
      %v578 = vpop.xlane.xlu0 %577
      %v579 = vsel %vm291, %v411, 0.0
      %580 = vadd.xlane.f32.xlu0 %v579
      %v581 = vpop.xlane.xlu0 %580
      %v582 = vsel %vm291, %v412, 0.0
      %583 = vadd.xlane.f32.xlu0 %v582
      %v584 = vpop.xlane.xlu0 %583
      %v585 = vsel %vm291, %v413, 0.0
      %586 = vadd.xlane.f32.xlu0 %v585
      %v587 = vpop.xlane.xlu0 %586
      %v588 = vsel %vm291, %v414, 0.0
      %589 = vadd.xlane.f32.xlu0 %v588
      %v590 = vpop.xlane.xlu0 %589
      %v591 = vsel %vm291, %v415, 0.0
      %592 = vadd.xlane.f32.xlu0 %v591
      %v593 = vpop.xlane.xlu0 %592
      %v594 = vsel %vm291, %v416, 0.0
      %595 = vadd.xlane.f32.xlu0 %v594
      %v596 = vpop.xlane.xlu0 %595
      %v597 = vsel %vm291, %v417, 0.0
      %598 = vadd.xlane.f32.xlu0 %v597
      %v599 = vpop.xlane.xlu0 %598
      %v600 = vsel %vm291, %v418, 0.0
      %601 = vadd.xlane.f32.xlu0 %v600
      %v602 = vpop.xlane.xlu0 %601
      %v603 = vsel %vm291, %v419, 0.0
      %604 = vadd.xlane.f32.xlu0 %v603
      %v605 = vpop.xlane.xlu0 %604
      %v606 = vsel %vm291, %v420, 0.0
      %607 = vadd.xlane.f32.xlu0 %v606
      %v608 = vpop.xlane.xlu0 %607
      %v609 = vsel %vm291, %v421, 0.0
      %610 = vadd.xlane.f32.xlu0 %v609
      %v611 = vpop.xlane.xlu0 %610
      %v612 = vsel %vm291, %v422, 0.0
      %613 = vadd.xlane.f32.xlu0 %v612
      %v614 = vpop.xlane.xlu0 %613
      %v615 = vmul.f32 %v425, 0.015625
      %v616 = vmul.f32 %v428, 0.015625
      %v617 = vmul.f32 %v431, 0.015625
      %v618 = vmul.f32 %v434, 0.015625
      %v619 = vmul.f32 %v437, 0.015625
      %v620 = vmul.f32 %v440, 0.015625
      %v621 = vmul.f32 %v443, 0.015625
      %v622 = vmul.f32 %v446, 0.015625
      %v623 = vmul.f32 %v449, 0.015625
      %v624 = vmul.f32 %v452, 0.015625
      %v625 = vmul.f32 %v455, 0.015625
      %v626 = vmul.f32 %v458, 0.015625
      %v627 = vmul.f32 %v461, 0.015625
      %v628 = vmul.f32 %v464, 0.015625
      %v629 = vmul.f32 %v467, 0.015625
      %v630 = vmul.f32 %v470, 0.015625
      %v631 = vmul.f32 %v473, 0.015625
      %v632 = vmul.f32 %v476, 0.015625
      %v633 = vmul.f32 %v479, 0.015625
      %v634 = vmul.f32 %v482, 0.015625
      %v635 = vmul.f32 %v485, 0.015625
      %v636 = vmul.f32 %v488, 0.015625
      %v637 = vmul.f32 %v491, 0.015625
      %v638 = vmul.f32 %v494, 0.015625
      %v639 = vmul.f32 %v497, 0.015625
      %v640 = vmul.f32 %v500, 0.015625
      %v641 = vmul.f32 %v503, 0.015625
      %v642 = vmul.f32 %v506, 0.015625
      %v643 = vmul.f32 %v509, 0.015625
      %v644 = vmul.f32 %v512, 0.015625
      %v645 = vmul.f32 %v515, 0.015625
      %v646 = vmul.f32 %v518, 0.015625
      %v647 = vmul.f32 %v521, 0.015625
      %v648 = vmul.f32 %v524, 0.015625
      %v649 = vmul.f32 %v527, 0.015625
      %v650 = vmul.f32 %v530, 0.015625
      %v651 = vmul.f32 %v533, 0.015625
      %v652 = vmul.f32 %v536, 0.015625
      %v653 = vmul.f32 %v539, 0.015625
      %v654 = vmul.f32 %v542, 0.015625
      %v655 = vmul.f32 %v545, 0.015625
      %v656 = vmul.f32 %v548, 0.015625
      %v657 = vmul.f32 %v551, 0.015625
      %v658 = vmul.f32 %v554, 0.015625
      %v659 = vmul.f32 %v557, 0.015625
      %v660 = vmul.f32 %v560, 0.015625
      %v661 = vmul.f32 %v563, 0.015625
      %v662 = vmul.f32 %v566, 0.015625
      %v663 = vmul.f32 %v569, 0.015625
      %v664 = vmul.f32 %v572, 0.015625
      %v665 = vmul.f32 %v575, 0.015625
      %v666 = vmul.f32 %v578, 0.015625
      %v667 = vmul.f32 %v581, 0.015625
      %v668 = vmul.f32 %v584, 0.015625
      %v669 = vmul.f32 %v587, 0.015625
      %v670 = vmul.f32 %v590, 0.015625
      %v671 = vmul.f32 %v593, 0.015625
      %v672 = vmul.f32 %v596, 0.015625
      %v673 = vmul.f32 %v599, 0.015625
      %v674 = vmul.f32 %v602, 0.015625
      %v675 = vmul.f32 %v605, 0.015625
      %v676 = vmul.f32 %v608, 0.015625
      %v677 = vmul.f32 %v611, 0.015625
      %v678 = vmul.f32 %v614, 0.015625
      %v679 = vld [vmem:[%s1] sm:$0xff]
      %v680 = vld [vmem:[%s1 + $0x8] sm:$0xff]
      %v681 = vld [vmem:[%s1 + $0x10] sm:$0xff]
      %v682 = vld [vmem:[%s1 + $0x18] sm:$0xff]
      %v683 = vld [vmem:[%s1 + $0x20] sm:$0xff]
      %v684 = vld [vmem:[%s1 + $0x28] sm:$0xff]
      %v685 = vld [vmem:[%s1 + $0x30] sm:$0xff]
      %v686 = vld [vmem:[%s1 + $0x38] sm:$0xff]
      %v687 = vld [vmem:[%s1 + $0x40] sm:$0xff]
      %v688 = vld [vmem:[%s1 + $0x48] sm:$0xff]
      %v689 = vld [vmem:[%s1 + $0x50] sm:$0xff]
      %v690 = vld [vmem:[%s1 + $0x58] sm:$0xff]
      %v691 = vld [vmem:[%s1 + $0x60] sm:$0xff]
      %v692 = vld [vmem:[%s1 + $0x68] sm:$0xff]
      %v693 = vld [vmem:[%s1 + $0x70] sm:$0xff]
      %v694 = vld [vmem:[%s1 + $0x78] sm:$0xff]
      %v695 = vld [vmem:[%s1 + $0x80] sm:$0xff]
      %v696 = vld [vmem:[%s1 + $0x88] sm:$0xff]
      %v697 = vld [vmem:[%s1 + $0x90] sm:$0xff]
      %v698 = vld [vmem:[%s1 + $0x98] sm:$0xff]
      %v699 = vld [vmem:[%s1 + $0xa0] sm:$0xff]
      %v700 = vld [vmem:[%s1 + $0xa8] sm:$0xff]
      %v701 = vld [vmem:[%s1 + $0xb0] sm:$0xff]
      %v702 = vld [vmem:[%s1 + $0xb8] sm:$0xff]
      %v703 = vld [vmem:[%s1 + $0xc0] sm:$0xff]
      %v704 = vld [vmem:[%s1 + $0xc8] sm:$0xff]
      %v705 = vld [vmem:[%s1 + $0xd0] sm:$0xff]
      %v706 = vld [vmem:[%s1 + $0xd8] sm:$0xff]
      %v707 = vld [vmem:[%s1 + $0xe0] sm:$0xff]
      %v708 = vld [vmem:[%s1 + $0xe8] sm:$0xff]
      %v709 = vld [vmem:[%s1 + $0xf0] sm:$0xff]
      %v710 = vld [vmem:[%s1 + $0xf8] sm:$0xff]
      %v711 = vld [vmem:[%s2] sm:$0x1]
      %v713 = vlaneseq
      %v714 = vshrl.u32 %v713, 7
      %v715 = vsub.s32 0, %v714
      %v716 = vrot.slane %v711, %v715
      %v782 = vlaneseq
      %v783 = vand.u32 %v782, 127
      %v784 = vlaneseq
      %v785 = vshrl.u32 %v784, 7
      %v786 = vsub.s32 %v783, %v785
      %v787 = vrot.slane %v615, %v786
      %v788 = vadd.s32 %v783, 4294967288
      %v789 = vlaneseq
      %v790 = vshrl.u32 %v789, 7
      %v791 = vsub.s32 %v788, %v790
      %v792 = vrot.slane %v616, %v791
      %vm793 = vcmask 130112
      %v794 = vsel %vm793, %v792, %v787
      %v795 = vadd.s32 %v783, 4294967280
      %v796 = vlaneseq
      %v797 = vshrl.u32 %v796, 7
      %v798 = vsub.s32 %v795, %v797
      %v799 = vrot.slane %v617, %v798
      %vm800 = vcmask 195712
      %v801 = vsel %vm800, %v799, %v794
      %v802 = vadd.s32 %v783, 4294967272
      %v803 = vlaneseq
      %v804 = vshrl.u32 %v803, 7
      %v805 = vsub.s32 %v802, %v804
      %v806 = vrot.slane %v618, %v805
      %vm807 = vcmask 261312
      %v808 = vsel %vm807, %v806, %v801
      %v809 = vadd.s32 %v783, 4294967264
      %v810 = vlaneseq
      %v811 = vshrl.u32 %v810, 7
      %v812 = vsub.s32 %v809, %v811
      %v813 = vrot.slane %v619, %v812
      %vm814 = vcmask 326912
      %v815 = vsel %vm814, %v813, %v808
      %v816 = vadd.s32 %v783, 4294967256
      %v817 = vlaneseq
      %v818 = vshrl.u32 %v817, 7
      %v819 = vsub.s32 %v816, %v818
      %v820 = vrot.slane %v620, %v819
      %vm821 = vcmask 392512
      %v822 = vsel %vm821, %v820, %v815
      %v823 = vadd.s32 %v783, 4294967248
      %v824 = vlaneseq
      %v825 = vshrl.u32 %v824, 7
      %v826 = vsub.s32 %v823, %v825
      %v827 = vrot.slane %v621, %v826
      %vm828 = vcmask 458112
      %v829 = vsel %vm828, %v827, %v822
      %v830 = vadd.s32 %v783, 4294967240
      %v831 = vlaneseq
      %v832 = vshrl.u32 %v831, 7
      %v833 = vsub.s32 %v830, %v832
      %v834 = vrot.slane %v622, %v833
      %vm835 = vcmask 523712
      %v836 = vsel %vm835, %v834, %v829
      %v837 = vadd.s32 %v783, 4294967232
      %v838 = vlaneseq
      %v839 = vshrl.u32 %v838, 7
      %v840 = vsub.s32 %v837, %v839
      %v841 = vrot.slane %v623, %v840
      %vm842 = vcmask 589312
      %v843 = vsel %vm842, %v841, %v836
      %v844 = vadd.s32 %v783, 4294967224
      %v845 = vlaneseq
      %v846 = vshrl.u32 %v845, 7
      %v847 = vsub.s32 %v844, %v846
      %v848 = vrot.slane %v624, %v847
      %vm849 = vcmask 654912
      %v850 = vsel %vm849, %v848, %v843
      %v851 = vadd.s32 %v783, 4294967216
      %v852 = vlaneseq
      %v853 = vshrl.u32 %v852, 7
      %v854 = vsub.s32 %v851, %v853
      %v855 = vrot.slane %v625, %v854
      %vm856 = vcmask 720512
      %v857 = vsel %vm856, %v855, %v850
      %v858 = vadd.s32 %v783, 4294967208
      %v859 = vlaneseq
      %v860 = vshrl.u32 %v859, 7
      %v861 = vsub.s32 %v858, %v860
      %v862 = vrot.slane %v626, %v861
      %vm863 = vcmask 786112
      %v864 = vsel %vm863, %v862, %v857
      %v865 = vadd.s32 %v783, 4294967200
      %v866 = vlaneseq
      %v867 = vshrl.u32 %v866, 7
      %v868 = vsub.s32 %v865, %v867
      %v869 = vrot.slane %v627, %v868
      %vm870 = vcmask 851712
      %v871 = vsel %vm870, %v869, %v864
      %v872 = vadd.s32 %v783, 4294967192
      %v873 = vlaneseq
      %v874 = vshrl.u32 %v873, 7
      %v875 = vsub.s32 %v872, %v874
      %v876 = vrot.slane %v628, %v875
      %vm877 = vcmask 917312
      %v878 = vsel %vm877, %v876, %v871
      %v879 = vadd.s32 %v783, 4294967184
      %v880 = vlaneseq
      %v881 = vshrl.u32 %v880, 7
      %v882 = vsub.s32 %v879, %v881
      %v883 = vrot.slane %v629, %v882
      %vm884 = vcmask 982912
      %v885 = vsel %vm884, %v883, %v878
      %v886 = vadd.s32 %v783, 4294967176
      %v887 = vlaneseq
      %v888 = vshrl.u32 %v887, 7
      %v889 = vsub.s32 %v886, %v888
      %v890 = vrot.slane %v630, %v889
      %vm891 = vcmask 1048512
      %v892 = vsel %vm891, %v890, %v885
      %v893 = vlaneseq
      %v894 = vshrl.u32 %v893, 7
      %v895 = vsub.s32 %v783, %v894
      %v896 = vrot.slane %v631, %v895
      %v897 = vlaneseq
      %v898 = vshrl.u32 %v897, 7
      %v899 = vsub.s32 %v788, %v898
      %v900 = vrot.slane %v632, %v899
      %v901 = vsel %vm793, %v900, %v896
      %v902 = vlaneseq
      %v903 = vshrl.u32 %v902, 7
      %v904 = vsub.s32 %v795, %v903
      %v905 = vrot.slane %v633, %v904
      %v906 = vsel %vm800, %v905, %v901
      %v907 = vlaneseq
      %v908 = vshrl.u32 %v907, 7
      %v909 = vsub.s32 %v802, %v908
      %v910 = vrot.slane %v634, %v909
      %v911 = vsel %vm807, %v910, %v906
      %v912 = vlaneseq
      %v913 = vshrl.u32 %v912, 7
      %v914 = vsub.s32 %v809, %v913
      %v915 = vrot.slane %v635, %v914
      %v916 = vsel %vm814, %v915, %v911
      %v917 = vlaneseq
      %v918 = vshrl.u32 %v917, 7
      %v919 = vsub.s32 %v816, %v918
      %v920 = vrot.slane %v636, %v919
      %v921 = vsel %vm821, %v920, %v916
      %v922 = vlaneseq
      %v923 = vshrl.u32 %v922, 7
      %v924 = vsub.s32 %v823, %v923
      %v925 = vrot.slane %v637, %v924
      %v926 = vsel %vm828, %v925, %v921
      %v927 = vlaneseq
      %v928 = vshrl.u32 %v927, 7
      %v929 = vsub.s32 %v830, %v928
      %v930 = vrot.slane %v638, %v929
      %v931 = vsel %vm835, %v930, %v926
      %v932 = vlaneseq
      %v933 = vshrl.u32 %v932, 7
      %v934 = vsub.s32 %v837, %v933
      %v935 = vrot.slane %v639, %v934
      %v936 = vsel %vm842, %v935, %v931
      %v937 = vlaneseq
      %v938 = vshrl.u32 %v937, 7
      %v939 = vsub.s32 %v844, %v938
      %v940 = vrot.slane %v640, %v939
      %v941 = vsel %vm849, %v940, %v936
      %v942 = vlaneseq
      %v943 = vshrl.u32 %v942, 7
      %v944 = vsub.s32 %v851, %v943
      %v945 = vrot.slane %v641, %v944
      %v946 = vsel %vm856, %v945, %v941
      %v947 = vlaneseq
      %v948 = vshrl.u32 %v947, 7
      %v949 = vsub.s32 %v858, %v948
      %v950 = vrot.slane %v642, %v949
      %v951 = vsel %vm863, %v950, %v946
      %v952 = vlaneseq
      %v953 = vshrl.u32 %v952, 7
      %v954 = vsub.s32 %v865, %v953
      %v955 = vrot.slane %v643, %v954
      %v956 = vsel %vm870, %v955, %v951
      %v957 = vlaneseq
      %v958 = vshrl.u32 %v957, 7
      %v959 = vsub.s32 %v872, %v958
      %v960 = vrot.slane %v644, %v959
      %v961 = vsel %vm877, %v960, %v956
      %v962 = vlaneseq
      %v963 = vshrl.u32 %v962, 7
      %v964 = vsub.s32 %v879, %v963
      %v965 = vrot.slane %v645, %v964
      %v966 = vsel %vm884, %v965, %v961
      %v967 = vlaneseq
      %v968 = vshrl.u32 %v967, 7
      %v969 = vsub.s32 %v886, %v968
      %v970 = vrot.slane %v646, %v969
      %v971 = vsel %vm891, %v970, %v966
      %v972 = vlaneseq
      %v973 = vshrl.u32 %v972, 7
      %v974 = vsub.s32 %v783, %v973
      %v975 = vrot.slane %v647, %v974
      %v976 = vlaneseq
      %v977 = vshrl.u32 %v976, 7
      %v978 = vsub.s32 %v788, %v977
      %v979 = vrot.slane %v648, %v978
      %v980 = vsel %vm793, %v979, %v975
      %v981 = vlaneseq
      %v982 = vshrl.u32 %v981, 7
      %v983 = vsub.s32 %v795, %v982
      %v984 = vrot.slane %v649, %v983
      %v985 = vsel %vm800, %v984, %v980
      %v986 = vlaneseq
      %v987 = vshrl.u32 %v986, 7
      %v988 = vsub.s32 %v802, %v987
      %v989 = vrot.slane %v650, %v988
      %v990 = vsel %vm807, %v989, %v985
      %v991 = vlaneseq
      %v992 = vshrl.u32 %v991, 7
      %v993 = vsub.s32 %v809, %v992
      %v994 = vrot.slane %v651, %v993
      %v995 = vsel %vm814, %v994, %v990
      %v996 = vlaneseq
      %v997 = vshrl.u32 %v996, 7
      %v998 = vsub.s32 %v816, %v997
      %v999 = vrot.slane %v652, %v998
      %v1000 = vsel %vm821, %v999, %v995
      %v1001 = vlaneseq
      %v1002 = vshrl.u32 %v1001, 7
      %v1003 = vsub.s32 %v823, %v1002
      %v1004 = vrot.slane %v653, %v1003
      %v1005 = vsel %vm828, %v1004, %v1000
      %v1006 = vlaneseq
      %v1007 = vshrl.u32 %v1006, 7
      %v1008 = vsub.s32 %v830, %v1007
      %v1009 = vrot.slane %v654, %v1008
      %v1010 = vsel %vm835, %v1009, %v1005
      %v1011 = vlaneseq
      %v1012 = vshrl.u32 %v1011, 7
      %v1013 = vsub.s32 %v837, %v1012
      %v1014 = vrot.slane %v655, %v1013
      %v1015 = vsel %vm842, %v1014, %v1010
      %v1016 = vlaneseq
      %v1017 = vshrl.u32 %v1016, 7
      %v1018 = vsub.s32 %v844, %v1017
      %v1019 = vrot.slane %v656, %v1018
      %v1020 = vsel %vm849, %v1019, %v1015
      %v1021 = vlaneseq
      %v1022 = vshrl.u32 %v1021, 7
      %v1023 = vsub.s32 %v851, %v1022
      %v1024 = vrot.slane %v657, %v1023
      %v1025 = vsel %vm856, %v1024, %v1020
      %v1026 = vlaneseq
      %v1027 = vshrl.u32 %v1026, 7
      %v1028 = vsub.s32 %v858, %v1027
      %v1029 = vrot.slane %v658, %v1028
      %v1030 = vsel %vm863, %v1029, %v1025
      %v1031 = vlaneseq
      %v1032 = vshrl.u32 %v1031, 7
      %v1033 = vsub.s32 %v865, %v1032
      %v1034 = vrot.slane %v659, %v1033
      %v1035 = vsel %vm870, %v1034, %v1030
      %v1036 = vlaneseq
      %v1037 = vshrl.u32 %v1036, 7
      %v1038 = vsub.s32 %v872, %v1037
      %v1039 = vrot.slane %v660, %v1038
      %v1040 = vsel %vm877, %v1039, %v1035
      %v1041 = vlaneseq
      %v1042 = vshrl.u32 %v1041, 7
      %v1043 = vsub.s32 %v879, %v1042
      %v1044 = vrot.slane %v661, %v1043
      %v1045 = vsel %vm884, %v1044, %v1040
      %v1046 = vlaneseq
      %v1047 = vshrl.u32 %v1046, 7
      %v1048 = vsub.s32 %v886, %v1047
      %v1049 = vrot.slane %v662, %v1048
      %v1050 = vsel %vm891, %v1049, %v1045
      %v1051 = vlaneseq
      %v1052 = vshrl.u32 %v1051, 7
      %v1053 = vsub.s32 %v783, %v1052
      %v1054 = vrot.slane %v663, %v1053
      %v1055 = vlaneseq
      %v1056 = vshrl.u32 %v1055, 7
      %v1057 = vsub.s32 %v788, %v1056
      %v1058 = vrot.slane %v664, %v1057
      %v1059 = vsel %vm793, %v1058, %v1054
      %v1060 = vlaneseq
      %v1061 = vshrl.u32 %v1060, 7
      %v1062 = vsub.s32 %v795, %v1061
      %v1063 = vrot.slane %v665, %v1062
      %v1064 = vsel %vm800, %v1063, %v1059
      %v1065 = vlaneseq
      %v1066 = vshrl.u32 %v1065, 7
      %v1067 = vsub.s32 %v802, %v1066
      %v1068 = vrot.slane %v666, %v1067
      %v1069 = vsel %vm807, %v1068, %v1064
      %v1070 = vlaneseq
      %v1071 = vshrl.u32 %v1070, 7
      %v1072 = vsub.s32 %v809, %v1071
      %v1073 = vrot.slane %v667, %v1072
      %v1074 = vsel %vm814, %v1073, %v1069
      %v1075 = vlaneseq
      %v1076 = vshrl.u32 %v1075, 7
      %v1077 = vsub.s32 %v816, %v1076
      %v1078 = vrot.slane %v668, %v1077
      %v1079 = vsel %vm821, %v1078, %v1074
      %v1080 = vlaneseq
      %v1081 = vshrl.u32 %v1080, 7
      %v1082 = vsub.s32 %v823, %v1081
      %v1083 = vrot.slane %v669, %v1082
      %v1084 = vsel %vm828, %v1083, %v1079
      %v1085 = vlaneseq
      %v1086 = vshrl.u32 %v1085, 7
      %v1087 = vsub.s32 %v830, %v1086
      %v1088 = vrot.slane %v670, %v1087
      %v1089 = vsel %vm835, %v1088, %v1084
      %v1090 = vlaneseq
      %v1091 = vshrl.u32 %v1090, 7
      %v1092 = vsub.s32 %v837, %v1091
      %v1093 = vrot.slane %v671, %v1092
      %v1094 = vsel %vm842, %v1093, %v1089
      %v1095 = vlaneseq
      %v1096 = vshrl.u32 %v1095, 7
      %v1097 = vsub.s32 %v844, %v1096
      %v1098 = vrot.slane %v672, %v1097
      %v1099 = vsel %vm849, %v1098, %v1094
      %v1100 = vlaneseq
      %v1101 = vshrl.u32 %v1100, 7
      %v1102 = vsub.s32 %v851, %v1101
      %v1103 = vrot.slane %v673, %v1102
      %v1104 = vsel %vm856, %v1103, %v1099
      %v1105 = vlaneseq
      %v1106 = vshrl.u32 %v1105, 7
      %v1107 = vsub.s32 %v858, %v1106
      %v1108 = vrot.slane %v674, %v1107
      %v1109 = vsel %vm863, %v1108, %v1104
      %v1110 = vlaneseq
      %v1111 = vshrl.u32 %v1110, 7
      %v1112 = vsub.s32 %v865, %v1111
      %v1113 = vrot.slane %v675, %v1112
      %v1114 = vsel %vm870, %v1113, %v1109
      %v1115 = vlaneseq
      %v1116 = vshrl.u32 %v1115, 7
      %v1117 = vsub.s32 %v872, %v1116
      %v1118 = vrot.slane %v676, %v1117
      %v1119 = vsel %vm877, %v1118, %v1114
      %v1120 = vlaneseq
      %v1121 = vshrl.u32 %v1120, 7
      %v1122 = vsub.s32 %v879, %v1121
      %v1123 = vrot.slane %v677, %v1122
      %v1124 = vsel %vm884, %v1123, %v1119
      %v1125 = vlaneseq
      %v1126 = vshrl.u32 %v1125, 7
      %v1127 = vsub.s32 %v886, %v1126
      %v1128 = vrot.slane %v678, %v1127
      %v1129 = vsel %vm891, %v1128, %v1124
      %vm1130 = vcmask 1041409
      %v1131 = vsel %vm1130, %v1050, %v892
      %v1132 = vsel %vm1130, %v1129, %v971
      %1135 = vmatprep.subr.mxu0 0.0
      %1136 = vmatpush1.msra.mxu0 %v694
      %1137 = vmatprep.subr.mxu0 0.0
      %1138 = vmatpush1.msra.mxu0 %v693
      %1139 = vmatprep.subr.mxu0 0.0
      %1140 = vmatpush1.msra.mxu0 %v692
      %1141 = vmatprep.subr.mxu0 0.0
      %1142 = vmatpush1.msra.mxu0 %v691
      %1143 = vmatprep.subr.mxu0 0.0
      %1144 = vmatpush1.msra.mxu0 %v690
      %1145 = vmatprep.subr.mxu0 0.0
      %1146 = vmatpush1.msra.mxu0 %v689
      %1147 = vmatprep.subr.mxu0 0.0
      %1148 = vmatpush1.msra.mxu0 %v688
      %1149 = vmatprep.subr.mxu0 0.0
      %1150 = vmatpush1.msra.mxu0 %v687
      %1151 = vmatprep.subr.mxu0 0.0
      %1152 = vmatpush1.msra.mxu0 %v686
      %1153 = vmatprep.subr.mxu0 0.0
      %1154 = vmatpush1.msra.mxu0 %v685
      %1155 = vmatprep.subr.mxu0 0.0
      %1156 = vmatpush1.msra.mxu0 %v684
      %1157 = vmatprep.subr.mxu0 0.0
      %1158 = vmatpush1.msra.mxu0 %v683
      %1159 = vmatprep.subr.mxu0 0.0
      %1160 = vmatpush1.msra.mxu0 %v682
      %1161 = vmatprep.subr.mxu0 0.0
      %1162 = vmatpush1.msra.mxu0 %v681
      %1163 = vmatprep.subr.mxu0 0.0
      %1164 = vmatpush1.msra.mxu0 %v680
      %1165 = vmatprep.subr.mxu0 0.0
      %1166 = vmatpush1.msra.mxu0 %v679
      %1167 = vmatprep.subr.mxu0 0.0
      %1168 = vmatpush2.msra.mxu0 %v710
      %1169 = vmatprep.subr.mxu0 0.0
      %1170 = vmatpush2.msra.mxu0 %v709
      %1171 = vmatprep.subr.mxu0 0.0
      %1172 = vmatpush2.msra.mxu0 %v708
      %1173 = vmatprep.subr.mxu0 0.0
      %1174 = vmatpush2.msra.mxu0 %v707
      %1175 = vmatprep.subr.mxu0 0.0
      %1176 = vmatpush2.msra.mxu0 %v706
      %1177 = vmatprep.subr.mxu0 0.0
      %1178 = vmatpush2.msra.mxu0 %v705
      %1179 = vmatprep.subr.mxu0 0.0
      %1180 = vmatpush2.msra.mxu0 %v704
      %1181 = vmatprep.subr.mxu0 0.0
      %1182 = vmatpush2.msra.mxu0 %v703
      %1183 = vmatprep.subr.mxu0 0.0
      %1184 = vmatpush2.msra.mxu0 %v702
      %1185 = vmatprep.subr.mxu0 0.0
      %1186 = vmatpush2.msra.mxu0 %v701
      %1187 = vmatprep.subr.mxu0 0.0
      %1188 = vmatpush2.msra.mxu0 %v700
      %1189 = vmatprep.subr.mxu0 0.0
      %1190 = vmatpush2.msra.mxu0 %v699
      %1191 = vmatprep.subr.mxu0 0.0
      %1192 = vmatpush2.msra.mxu0 %v698
      %1193 = vmatprep.subr.mxu0 0.0
      %1194 = vmatpush2.msra.mxu0 %v697
      %1195 = vmatprep.subr.mxu0 0.0
      %1196 = vmatpush2.msra.mxu0 %v696
      %1197 = vmatprep.subr.mxu0 0.0
      %1198 = vmatpush2.msra.mxu0 %v695
      %1199 = vmatprep.mubr.f32.mxu0 %v1132
      %1200 = vmatmul.mubr.f32.gmra.mxu0 %v1131
      %v1201 = vpop.f32.mrf.mxu0
      %v1202 = vadd.f32 %v716, %v1201
      %v1203 = vpop.f32.mrf.mxu0
      %1204 = vdwg.mxu0
      %v1205 = vmax.f32 %v1202, 0.0
      %v1206 = vld [vmem:[%s3] sm:$0xff]
      %v1207 = vld [vmem:[%s3 + $0x8] sm:$0xff]
      %v1208 = vld [vmem:[%s3 + $0x10] sm:$0xff]
      %v1209 = vld [vmem:[%s3 + $0x18] sm:$0xff]
      %v1210 = vld [vmem:[%s4] sm:$0x3]
      %v1212 = vlaneseq
      %v1213 = vshrl.u32 %v1212, 7
      %v1214 = vsub.s32 0, %v1213
      %v1215 = vrot.slane %v1210, %v1214
      %v1216 = vlaneseq
      %v1217 = vshrl.u32 %v1216, 7
      %v1218 = vsub.s32 1, %v1217
      %v1219 = vrot.slane %v1210, %v1218
      %vm1222 = vcmask 130048
      %v1224 = vsel %vm1222, %v1205, 0
      %1226 = vmatprep.subr.mxu0 0.0
      %1227 = vmatpush1.msra.mxu0 0.0
      %1228 = vmatprep.subr.mxu0 0.0
      %1229 = vmatpush1.msra.mxu0 0.0
      %1230 = vmatprep.subr.mxu0 0.0
      %1231 = vmatpush1.msra.mxu0 0.0
      %1232 = vmatprep.subr.mxu0 0.0
      %1233 = vmatpush1.msra.mxu0 0.0
      %1234 = vmatprep.subr.mxu0 0.0
      %1235 = vmatpush1.msra.mxu0 0.0
      %1236 = vmatprep.subr.mxu0 0.0
      %1237 = vmatpush1.msra.mxu0 0.0
      %1238 = vmatprep.subr.mxu0 0.0
      %1239 = vmatpush1.msra.mxu0 0.0
      %1240 = vmatprep.subr.mxu0 0.0
      %1241 = vmatpush1.msra.mxu0 0.0
      %1242 = vmatprep.subr.mxu0 0.0
      %1243 = vmatpush1.msra.mxu0 0.0
      %1244 = vmatprep.subr.mxu0 0.0
      %1245 = vmatpush1.msra.mxu0 0.0
      %1246 = vmatprep.subr.mxu0 0.0
      %1247 = vmatpush1.msra.mxu0 0.0
      %1248 = vmatprep.subr.mxu0 0.0
      %1249 = vmatpush1.msra.mxu0 0.0
      %1250 = vmatprep.subr.mxu0 0.0
      %1251 = vmatpush1.msra.mxu0 0.0
      %1252 = vmatprep.subr.mxu0 0.0
      %1253 = vmatpush1.msra.mxu0 0.0
      %1254 = vmatprep.subr.mxu0 %v1209
      %1255 = vmatpush1.msra.mxu0 %v1208
      %1256 = vmatprep.subr.mxu0 %v1207
      %1257 = vmatpush1.msra.mxu0 %v1206
      %1258 = vmatprep.subr.mxu0 0.0
      %1259 = vmatpush2.msra.mxu0 0.0
      %1260 = vmatprep.subr.mxu0 0.0
      %1261 = vmatpush2.msra.mxu0 0.0
      %1262 = vmatprep.subr.mxu0 0.0
      %1263 = vmatpush2.msra.mxu0 0.0
      %1264 = vmatprep.subr.mxu0 0.0
      %1265 = vmatpush2.msra.mxu0 0.0
      %1266 = vmatprep.subr.mxu0 0.0
      %1267 = vmatpush2.msra.mxu0 0.0
      %1268 = vmatprep.subr.mxu0 0.0
      %1269 = vmatpush2.msra.mxu0 0.0
      %1270 = vmatprep.subr.mxu0 0.0
      %1271 = vmatpush2.msra.mxu0 0.0
      %1272 = vmatprep.subr.mxu0 0.0
      %1273 = vmatpush2.msra.mxu0 0.0
      %1274 = vmatprep.subr.mxu0 0.0
      %1275 = vmatpush2.msra.mxu0 0.0
      %1276 = vmatprep.subr.mxu0 0.0
      %1277 = vmatpush2.msra.mxu0 0.0
      %1278 = vmatprep.subr.mxu0 0.0
      %1279 = vmatpush2.msra.mxu0 0.0
      %1280 = vmatprep.subr.mxu0 0.0
      %1281 = vmatpush2.msra.mxu0 0.0
      %1282 = vmatprep.subr.mxu0 0.0
      %1283 = vmatpush2.msra.mxu0 0.0
      %1284 = vmatprep.subr.mxu0 0.0
      %1285 = vmatpush2.msra.mxu0 0.0
      %1286 = vmatprep.subr.mxu0 0.0
      %1287 = vmatpush2.msra.mxu0 0.0
      %1288 = vmatprep.subr.mxu0 0.0
      %1289 = vmatpush2.msra.mxu0 0.0
      %1290 = vmatprep.mubr.f32.mxu0 0.0
      %1291 = vmatmul.mubr.f32.gmra.mxu0 %v1224
      %v1292 = vpop.f32.mrf.mxu0
      %v1293 = vadd.f32 %v1215, %v1292
      %v1294 = vpop.f32.mrf.mxu0
      %v1295 = vadd.f32 %v1219, %v1294
      %1296 = vdwg.mxu0
      %v1297 = vxor.u32 %v1293, 2147483648
      %v1298 = vxor.u32 %v1295, 2147483648
      %v1299 = vmul.f32 %v1297, 1.442695
      %v1300 = vpow.pop %v1299
      %v1301 = vmul.f32 %v1298, 1.442695
      %v1302 = vpow.pop %v1301
      %v1303 = vadd.f32 %v1300, 1.0
      %v1304 = vadd.f32 %v1302, 1.0
      %v1305 = vrcp.pop %v1303
      %v1306 = vmul.f32 1.0, %v1305
      %v1307 = vrcp.pop %v1304
      %v1308 = vmul.f32 1.0, %v1307
      %v1311 = vcombine.low %v1306, %v1308
      %v1313 = vunpack.c.l.s4 1983009808
      %v1314 = vunpack.c.0.s8 %v1313
      %v1315 = vlaneseq
      %v1316 = vshrl.u32 %v1315, 7
      %v1317 = vsub.s32 %v1314, %v1316
      %v1318 = vrot.slane %v1311, %v1317
      %1320 = vst [vmem:[#allocation3] sm:$0xf] %v1318
      %v1321 = vld [vmem:[%s5] sm:$0xff]
      %v1322 = vld [vmem:[%s5 + $0x8] sm:$0xff]
      %v1323 = vld [vmem:[%s6] sm:$0x1]
      %v1325 = vlaneseq
      %v1326 = vshrl.u32 %v1325, 7
      %v1327 = vsub.s32 0, %v1326
      %v1328 = vrot.slane %v1323, %v1327
      %1330 = vmatprep.subr.mxu0 0.0
      %1331 = vmatpush1.msra.mxu0 0.0
      %1332 = vmatprep.subr.mxu0 0.0
      %1333 = vmatpush1.msra.mxu0 0.0
      %1334 = vmatprep.subr.mxu0 0.0
      %1335 = vmatpush1.msra.mxu0 0.0
      %1336 = vmatprep.subr.mxu0 0.0
      %1337 = vmatpush1.msra.mxu0 0.0
      %1338 = vmatprep.subr.mxu0 0.0
      %1339 = vmatpush1.msra.mxu0 0.0
      %1340 = vmatprep.subr.mxu0 0.0
      %1341 = vmatpush1.msra.mxu0 0.0
      %1342 = vmatprep.subr.mxu0 0.0
      %1343 = vmatpush1.msra.mxu0 0.0
      %1344 = vmatprep.subr.mxu0 0.0
      %1345 = vmatpush1.msra.mxu0 0.0
      %1346 = vmatprep.subr.mxu0 0.0
      %1347 = vmatpush1.msra.mxu0 0.0
      %1348 = vmatprep.subr.mxu0 0.0
      %1349 = vmatpush1.msra.mxu0 0.0
      %1350 = vmatprep.subr.mxu0 0.0
      %1351 = vmatpush1.msra.mxu0 0.0
      %1352 = vmatprep.subr.mxu0 0.0
      %1353 = vmatpush1.msra.mxu0 0.0
      %1354 = vmatprep.subr.mxu0 0.0
      %1355 = vmatpush1.msra.mxu0 0.0
      %1356 = vmatprep.subr.mxu0 0.0
      %1357 = vmatpush1.msra.mxu0 0.0
      %1358 = vmatprep.subr.mxu0 0.0
      %1359 = vmatpush1.msra.mxu0 %v1322
      %1360 = vmatprep.subr.mxu0 0.0
      %1361 = vmatpush1.msra.mxu0 %v1321
      %1362 = vmatprep.subr.mxu0 0.0
      %1363 = vmatpush2.msra.mxu0 0.0
      %1364 = vmatprep.subr.mxu0 0.0
      %1365 = vmatpush2.msra.mxu0 0.0
      %1366 = vmatprep.subr.mxu0 0.0
      %1367 = vmatpush2.msra.mxu0 0.0
      %1368 = vmatprep.subr.mxu0 0.0
      %1369 = vmatpush2.msra.mxu0 0.0
      %1370 = vmatprep.subr.mxu0 0.0
      %1371 = vmatpush2.msra.mxu0 0.0
      %1372 = vmatprep.subr.mxu0 0.0
      %1373 = vmatpush2.msra.mxu0 0.0
      %1374 = vmatprep.subr.mxu0 0.0
      %1375 = vmatpush2.msra.mxu0 0.0
      %1376 = vmatprep.subr.mxu0 0.0
      %1377 = vmatpush2.msra.mxu0 0.0
      %1378 = vmatprep.subr.mxu0 0.0
      %1379 = vmatpush2.msra.mxu0 0.0
      %1380 = vmatprep.subr.mxu0 0.0
      %1381 = vmatpush2.msra.mxu0 0.0
      %1382 = vmatprep.subr.mxu0 0.0
      %1383 = vmatpush2.msra.mxu0 0.0
      %1384 = vmatprep.subr.mxu0 0.0
      %1385 = vmatpush2.msra.mxu0 0.0
      %1386 = vmatprep.subr.mxu0 0.0
      %1387 = vmatpush2.msra.mxu0 0.0
      %1388 = vmatprep.subr.mxu0 0.0
      %1389 = vmatpush2.msra.mxu0 0.0
      %1390 = vmatprep.subr.mxu0 0.0
      %1391 = vmatpush2.msra.mxu0 0.0
      %1392 = vmatprep.subr.mxu0 0.0
      %1393 = vmatpush2.msra.mxu0 0.0
      %1394 = vmatprep.mubr.f32.mxu0 0.0
      %1395 = vmatmul.mubr.f32.gmra.mxu0 %v1224
      %v1396 = vpop.f32.mrf.mxu0
      %v1397 = vadd.f32 %v1328, %v1396
      %v1398 = vpop.f32.mrf.mxu0
      %1399 = vdwg.mxu0
      %vm1400 = vcmask 9216
      %1401 = vst.msk [vmem:[#allocation5] sm:$0x3] %vm1400, %v1397
    $region37: #{tpu_custom_call.1} parent=1 // pred_fallthru
      _
    // Predicated region
    $region38: #{tpu_custom_call.1} parent=1 // pred_check
      _
    $region39: #{tpu_custom_call.1} parent=1 // pred_check_branch
      %1403 = sbr.rel (0) target = $region41
    $region40: #{tpu_custom_call.1} parent=1 // pred_region
      %s1405 = ssub.s32 64, 64
      %1406 = vsyncadd [#allocation4], %s1405
      %s1408 = sshll.u32 [#allocation3], 4
      %s1409 = int_to_ptr.vmem [resolvable:$true] %s1408
      %1411 = dma.vmem_to_hbm [thread:$0]  %s1409, 64, %s7, [#allocation4]
    $region41: #{tpu_custom_call.1} parent=1 // pred_fallthru
      _
    // Predicated region
    $region42: #{tpu_custom_call.1} parent=1 // pred_check
      _
    $region43: #{tpu_custom_call.1} parent=1 // pred_check_branch
      %1413 = sbr.rel (0) target = $region45
    $region44: #{tpu_custom_call.1} parent=1 // pred_region
      %s1415 = ssub.s32 32, 32
      %1416 = vsyncadd [#allocation6], %s1415
      %s1418 = sshll.u32 [#allocation5], 4
      %s1419 = int_to_ptr.vmem [resolvable:$true] %s1418
      %1421 = dma.vmem_to_hbm [thread:$0]  %s1419, 32, %s8, [#allocation6]
    $region45: #{tpu_custom_call.1} parent=1 // pred_fallthru
      _
    // Predicated region
    $region46: #{tpu_custom_call.1} parent=1 // pred_check
      _
    $region47: #{tpu_custom_call.1} parent=1 // pred_check_branch
      %1423 = sbr.rel (0) target = $region49
    $region48: #{tpu_custom_call.1} parent=1 // pred_region
      %1424 = dma.done [#allocation4], 64
    $region49: #{tpu_custom_call.1} parent=1 // pred_fallthru
      _
    // Predicated region
    $region50: #{tpu_custom_call.1} parent=1 // pred_check
      _
    $region51: #{tpu_custom_call.1} parent=1 // pred_check_branch
      %1426 = sbr.rel (0) target = $region53
    $region52: #{tpu_custom_call.1} parent=1 // pred_region
      %1427 = dma.done [#allocation6], 32
    $region53: #{tpu_custom_call.1} parent=1 // pred_fallthru
      _
    %1428 = vsyncpa [#allocation4], 1
    %1429 = vsyncpa [#allocation6], 1

</llo_original>
